<compile_context>
chip_gen: v5e
topology: v5e:2x2
jax: 0.10.0
libtpu: 0.0.40
codegen_flags: <defaults>
</compile_context>

<pallas_src>
import functools
import math

import numpy as np
import jax
import jax.numpy as jnp
from jax.experimental import pallas as pl
from jax.experimental.pallas import tpu as pltpu


def _gaussian_1d(window_size: int, sigma: float = 1.5):
    """1D Gaussian, identical to gaussian() in the PyTorch reference."""
    g = [math.exp(-((x - window_size // 2) ** 2) / (2.0 * sigma ** 2))
         for x in range(window_size)]
    s = sum(g)
    return [v / s for v in g]


def _h_band_matrix(W: int, Wo: int, Wo_pad: int, w1d) -> np.ndarray:
    """Static (W, Wo_pad) banded matrix: (col_sums @ band)[o, q] =
    sum_dj w1d[dj] * col_sums[o, q + dj]  (VALID 1D conv along lanes).
    Columns >= Wo are all-zero pad (masked at the reduction)."""
    ws = len(w1d)
    band = np.zeros((W, Wo_pad), np.float32)
    for q in range(Wo):
        for dj in range(ws):
            band[q + dj, q] = w1d[dj]
    return band


def _ssim_sum_kernel(cc_ref, band_ref, x1_ref, x2_ref, out_ref,
                     *, C, ws, H, W, Ho, Wo, Wo_pad, w1d):
    """One batch element: separable Gaussian conv over all C channels and all
    5 conv planes (vertical taps on the VPU, ONE banded matmul on the MXU),
    lane-dense elementwise SSIM map, masked in-kernel sum reduction."""
    C1 = cc_ref[0]
    C2 = cc_ref[1]

    x1 = x1_ref[0].astype(jnp.float32)           # (C, H, W)
    x2 = x2_ref[0].astype(jnp.float32)           # (C, H, W)

    # Five conv planes for every channel, stacked on the leading (page) axis
    # so the vertical pass and the horizontal matmul each happen ONCE.
    stack = jnp.concatenate([x1, x2, x1 * x1, x2 * x2, x1 * x2], axis=0)  # (5C, H, W)

    # Vertical 1D Gaussian: ws sublane-shifted full-lane-width slices over the
    # whole stack.
    # TODO(synk): for W >= ~128 this VALU pass saturates first; move it onto
    # the MXU as a left banded matmul per strip.
    acc = w1d[0] * stack[:, 0:Ho, :]
    for di in range(1, ws):
        acc = acc + w1d[di] * stack[:, di:di + Ho, :]          # (5C, Ho, W)

    # Horizontal 1D Gaussian: one lane-dense banded matmul, M = 5*C*Ho.
    lhs = acc.reshape(5 * C * Ho, W)
    conv = jnp.dot(lhs, band_ref[...],
                   preferred_element_type=jnp.float32)          # (5C*Ho, Wo_pad)
    conv = conv.reshape(5, C * Ho, Wo_pad)

    mu1, mu2, s11, s22, s12 = conv[0], conv[1], conv[2], conv[3], conv[4]

    mu1_sq = mu1 * mu1
    mu2_sq = mu2 * mu2
    mu1_mu2 = mu1 * mu2
    sigma1_sq = s11 - mu1_sq
    sigma2_sq = s22 - mu2_sq
    sigma12 = s12 - mu1_mu2

    v1 = 2.0 * sigma12 + C2
    v2 = sigma1_sq + sigma2_sq + C2
    num = (2.0 * mu1_mu2 + C1) * v1
    den = (mu1_sq + mu2_sq + C1) * v2
    # TODO(synk): pl.reciprocal(den, approx=True) would move this divide onto
    # the idle EUP; kept exact here to preserve the tight numerical match.
    ssim_map = num / den                                        # (C*Ho, Wo_pad)

    # Stay lane-dense all the way; mask the zero-pad columns only at the final
    # reduction (they would otherwise evaluate to exactly 1 and bias the mean)
    # and emit only the per-batch sum (no full-map HBM writeback).
    col = jax.lax.broadcasted_iota(jnp.int32, (C * Ho, Wo_pad), 1)
    masked = jnp.where(col < Wo, ssim_map, 0.0)
    row = jnp.sum(masked, axis=1, keepdims=True)                # (C*Ho, 1)
    out_ref[0] = jnp.sum(row, axis=0, keepdims=True)            # (1, 1)


def ssim_pallas(img1, img2, window_size=11, size_average=True, val_range=None):
    B, C, H, W = img1.shape
    ws = min(window_size, H, W)          # matches real_size in the reference
    Ho, Wo = H - ws + 1, W - ws + 1
    Wo_pad = ((Wo + 127) // 128) * 128   # lane-dense MXU output width

    # Data-dependent dynamic range L (same logic as the PyTorch reference).
    # Pass val_range explicitly to skip this extra pass over img1.
    if val_range is None:
        max_val = jnp.where(jnp.max(img1) > 128, 255.0, 1.0)
        min_val = jnp.where(jnp.min(img1) < -0.5, -1.0, 0.0)
        L = max_val - min_val
    else:
        L = jnp.float32(val_range)
    C1 = (0.01 * L) ** 2
    C2 = (0.03 * L) ** 2
    consts = jnp.stack([C1, C2]).astype(jnp.float32)            # (2,) -> SMEM

    w1d = _gaussian_1d(ws)                                      # baked constants
    hband = jnp.asarray(_h_band_matrix(W, Wo, Wo_pad, w1d))     # (W, Wo_pad)

    kern = functools.partial(_ssim_sum_kernel, C=C, ws=ws, H=H, W=W,
                             Ho=Ho, Wo=Wo, Wo_pad=Wo_pad, w1d=tuple(w1d))

    batch_sums = pl.pallas_call(
        kern,
        out_shape=jax.ShapeDtypeStruct((B, 1, 1), jnp.float32),
        grid=(B,),
        in_specs=[
            pl.BlockSpec(memory_space=pltpu.MemorySpace.SMEM),        # C1, C2
            pl.BlockSpec((W, Wo_pad), lambda b: (0, 0)),              # band
            pl.BlockSpec((1, C, H, W), lambda b: (b, 0, 0, 0)),       # img1
            pl.BlockSpec((1, C, H, W), lambda b: (b, 0, 0, 0)),       # img2
        ],
        out_specs=pl.BlockSpec((1, 1, 1), lambda b: (b, 0, 0)),
        compiler_params=pltpu.CompilerParams(
            dimension_semantics=("parallel",),       # shards across v7x TCs
            vmem_limit_bytes=32 * 1024 * 1024),      # v5e scoped default is 16 MiB
    )(consts, hband, img1, img2)                     # native dtype, cast in-kernel

    sums = batch_sums[:, 0, 0]                       # (B,) per-image sums
    per_image = float(C * Ho * Wo)
    if size_average:
        return jnp.sum(sums) / (B * per_image)
    return sums / per_image                          # (B,), matches mean(1).mean(1).mean(1)


def _ssim_ref(img1, img2, window_size=11):
    """Pure-JAX reference (lax depthwise conv), mirrors the PyTorch code."""
    B, C, H, W = img1.shape
    ws = min(window_size, H, W)
    max_val = jnp.where(jnp.max(img1) > 128, 255.0, 1.0)
    min_val = jnp.where(jnp.min(img1) < -0.5, -1.0, 0.0)
    L = max_val - min_val
    C1 = (0.01 * L) ** 2
    C2 = (0.03 * L) ** 2
    g = jnp.asarray(_gaussian_1d(ws), dtype=jnp.float32)
    win2d = jnp.outer(g, g)
    kernel = jnp.broadcast_to(win2d, (C, 1, ws, ws))

    def conv(x):
        return jax.lax.conv_general_dilated(
            x, kernel, (1, 1), "VALID",
            dimension_numbers=("NCHW", "OIHW", "NCHW"),
            feature_group_count=C)

    mu1 = conv(img1); mu2 = conv(img2)
    mu1_sq = mu1 ** 2; mu2_sq = mu2 ** 2; mu1_mu2 = mu1 * mu2
    sigma1_sq = conv(img1 * img1) - mu1_sq
    sigma2_sq = conv(img2 * img2) - mu2_sq
    sigma12 = conv(img1 * img2) - mu1_mu2
    v1 = 2.0 * sigma12 + C2
    v2 = sigma1_sq + sigma2_sq + C2
    ssim_map = (2 * mu1_mu2 + C1) * v1 / ((mu1_sq + mu2_sq + C1) * v2)
    return jnp.mean(ssim_map)


if __name__ == "__main__":
    key = jax.random.PRNGKey(0)
    k1, k2 = jax.random.split(key)
    # Spatial must be >= window_size (11); 16x16 matches the VALID conv.
    img1 = jax.random.normal(k1, (2, 4, 16, 16), dtype=jnp.float32)
    img2 = jax.random.normal(k2, (2, 4, 16, 16), dtype=jnp.float32)

    out = jax.block_until_ready(ssim_pallas(img1, img2))
    ref = jax.block_until_ready(_ssim_ref(img1, img2))
    assert jnp.allclose(out, ref, rtol=1e-3, atol=1e-5), (out, ref)

    print("KERNEL_OK")
</pallas_src>

<mosaic_0001>
module attributes {stable_mosaic.version = 11 : i64} {
  func.func @_ssim_sum_kernel(%arg0: i32, %arg1: memref<2xf32, #tpu.memory_space<smem>>, %arg2: memref<16x128xf32, #tpu.memory_space<vmem>>, %arg3: memref<1x4x16x16xf32, #tpu.memory_space<vmem>>, %arg4: memref<1x4x16x16xf32, #tpu.memory_space<vmem>>, %arg5: memref<1x1x1xf32, #tpu.memory_space<vmem>>) attributes {dimension_semantics = [#tpu.dimension_semantics<parallel>], iteration_bounds = array<i64: 2>, scalar_prefetch = 0 : i64, scratch_operands = 0 : i64, tpu.core_type = #tpu.core_type<tc>, window_params = [{transform_indices = @transform_0, window_bounds = array<i64: 2>}, {pipeline_mode = #tpu.pipeline_mode<synchronous>, transform_indices = @transform_1, window_bounds = array<i64: 16, 128>}, {transform_indices = @transform_2, window_bounds = array<i64: 1, 4, 16, 16>}, {transform_indices = @transform_3, window_bounds = array<i64: 1, 4, 16, 16>}, {transform_indices = @transform_4, window_bounds = array<i64: 1, 1, 1>}]} {
    %c0 = arith.constant 0 : index
    %0 = memref.load %arg1[%c0] : memref<2xf32, #tpu.memory_space<smem>>
    %c1 = arith.constant 1 : index
    %1 = memref.load %arg1[%c1] : memref<2xf32, #tpu.memory_space<smem>>
    %c0_0 = arith.constant 0 : index
    %c0_1 = arith.constant 0 : index
    %c0_2 = arith.constant 0 : index
    %c0_3 = arith.constant 0 : index
    %2 = vector.load %arg3[%c0_0, %c0_1, %c0_2, %c0_3] : memref<1x4x16x16xf32, #tpu.memory_space<vmem>>, vector<1x4x16x16xf32>
    %3 = vector.shape_cast %2 : vector<1x4x16x16xf32> to vector<4x16x16xf32>
    %c0_4 = arith.constant 0 : index
    %c0_5 = arith.constant 0 : index
    %c0_6 = arith.constant 0 : index
    %c0_7 = arith.constant 0 : index
    %4 = vector.load %arg4[%c0_4, %c0_5, %c0_6, %c0_7] : memref<1x4x16x16xf32, #tpu.memory_space<vmem>>, vector<1x4x16x16xf32>
    %5 = vector.shape_cast %4 : vector<1x4x16x16xf32> to vector<4x16x16xf32>
    %6 = arith.mulf %3, %3 : vector<4x16x16xf32>
    %7 = arith.mulf %5, %5 : vector<4x16x16xf32>
    %8 = arith.mulf %3, %5 : vector<4x16x16xf32>
    %9 = tpu.concatenate %3, %5, %6, %7, %8 in 0 : vector<4x16x16xf32>, vector<4x16x16xf32>, vector<4x16x16xf32>, vector<4x16x16xf32>, vector<4x16x16xf32> -> vector<20x16x16xf32>
    %10 = vector.extract_strided_slice %9 {offsets = [0, 0, 0], sizes = [20, 6, 16], strides = [1, 1, 1]} : vector<20x16x16xf32> to vector<20x6x16xf32>
    %cst = arith.constant 0.00102838012 : f32
    %11 = vector.broadcast %cst : f32 to vector<20x6x16xf32>
    %12 = arith.mulf %11, %10 : vector<20x6x16xf32>
    %13 = vector.extract_strided_slice %9 {offsets = [0, 1, 0], sizes = [20, 6, 16], strides = [1, 1, 1]} : vector<20x16x16xf32> to vector<20x6x16xf32>
    %cst_8 = arith.constant 0.00759875821 : f32
    %14 = vector.broadcast %cst_8 : f32 to vector<20x6x16xf32>
    %15 = arith.mulf %14, %13 : vector<20x6x16xf32>
    %16 = arith.addf %12, %15 : vector<20x6x16xf32>
    %17 = vector.extract_strided_slice %9 {offsets = [0, 2, 0], sizes = [20, 6, 16], strides = [1, 1, 1]} : vector<20x16x16xf32> to vector<20x6x16xf32>
    %cst_9 = arith.constant 0.0360007733 : f32
    %18 = vector.broadcast %cst_9 : f32 to vector<20x6x16xf32>
    %19 = arith.mulf %18, %17 : vector<20x6x16xf32>
    %20 = arith.addf %16, %19 : vector<20x6x16xf32>
    %21 = vector.extract_strided_slice %9 {offsets = [0, 3, 0], sizes = [20, 6, 16], strides = [1, 1, 1]} : vector<20x16x16xf32> to vector<20x6x16xf32>
    %cst_10 = arith.constant 0.109360687 : f32
    %22 = vector.broadcast %cst_10 : f32 to vector<20x6x16xf32>
    %23 = arith.mulf %22, %21 : vector<20x6x16xf32>
    %24 = arith.addf %20, %23 : vector<20x6x16xf32>
    %25 = vector.extract_strided_slice %9 {offsets = [0, 4, 0], sizes = [20, 6, 16], strides = [1, 1, 1]} : vector<20x16x16xf32> to vector<20x6x16xf32>
    %cst_11 = arith.constant 0.213005543 : f32
    %26 = vector.broadcast %cst_11 : f32 to vector<20x6x16xf32>
    %27 = arith.mulf %26, %25 : vector<20x6x16xf32>
    %28 = arith.addf %24, %27 : vector<20x6x16xf32>
    %29 = vector.extract_strided_slice %9 {offsets = [0, 5, 0], sizes = [20, 6, 16], strides = [1, 1, 1]} : vector<20x16x16xf32> to vector<20x6x16xf32>
    %cst_12 = arith.constant 0.266011715 : f32
    %30 = vector.broadcast %cst_12 : f32 to vector<20x6x16xf32>
    %31 = arith.mulf %30, %29 : vector<20x6x16xf32>
    %32 = arith.addf %28, %31 : vector<20x6x16xf32>
    %33 = vector.extract_strided_slice %9 {offsets = [0, 6, 0], sizes = [20, 6, 16], strides = [1, 1, 1]} : vector<20x16x16xf32> to vector<20x6x16xf32>
    %cst_13 = arith.constant 0.213005543 : f32
    %34 = vector.broadcast %cst_13 : f32 to vector<20x6x16xf32>
    %35 = arith.mulf %34, %33 : vector<20x6x16xf32>
    %36 = arith.addf %32, %35 : vector<20x6x16xf32>
    %37 = vector.extract_strided_slice %9 {offsets = [0, 7, 0], sizes = [20, 6, 16], strides = [1, 1, 1]} : vector<20x16x16xf32> to vector<20x6x16xf32>
    %cst_14 = arith.constant 0.109360687 : f32
    %38 = vector.broadcast %cst_14 : f32 to vector<20x6x16xf32>
    %39 = arith.mulf %38, %37 : vector<20x6x16xf32>
    %40 = arith.addf %36, %39 : vector<20x6x16xf32>
    %41 = vector.extract_strided_slice %9 {offsets = [0, 8, 0], sizes = [20, 6, 16], strides = [1, 1, 1]} : vector<20x16x16xf32> to vector<20x6x16xf32>
    %cst_15 = arith.constant 0.0360007733 : f32
    %42 = vector.broadcast %cst_15 : f32 to vector<20x6x16xf32>
    %43 = arith.mulf %42, %41 : vector<20x6x16xf32>
    %44 = arith.addf %40, %43 : vector<20x6x16xf32>
    %45 = vector.extract_strided_slice %9 {offsets = [0, 9, 0], sizes = [20, 6, 16], strides = [1, 1, 1]} : vector<20x16x16xf32> to vector<20x6x16xf32>
    %cst_16 = arith.constant 0.00759875821 : f32
    %46 = vector.broadcast %cst_16 : f32 to vector<20x6x16xf32>
    %47 = arith.mulf %46, %45 : vector<20x6x16xf32>
    %48 = arith.addf %44, %47 : vector<20x6x16xf32>
    %49 = vector.extract_strided_slice %9 {offsets = [0, 10, 0], sizes = [20, 6, 16], strides = [1, 1, 1]} : vector<20x16x16xf32> to vector<20x6x16xf32>
    %cst_17 = arith.constant 0.00102838012 : f32
    %50 = vector.broadcast %cst_17 : f32 to vector<20x6x16xf32>
    %51 = arith.mulf %50, %49 : vector<20x6x16xf32>
    %52 = arith.addf %48, %51 : vector<20x6x16xf32>
    %53 = vector.shape_cast %52 : vector<20x6x16xf32> to vector<120x16xf32>
    %c0_18 = arith.constant 0 : index
    %c0_19 = arith.constant 0 : index
    %54 = vector.load %arg2[%c0_18, %c0_19] : memref<16x128xf32, #tpu.memory_space<vmem>>, vector<16x128xf32>
    %cst_20 = arith.constant dense<0.000000e+00> : vector<120x128xf32>
    %55 = tpu.matmul %53, %54, %cst_20 {dimension_numbers = #tpu.dot_dimension_numbers<[1], [0], [0], [1], [0, 0, 1, 1], [], []>} : vector<120x16xf32>, vector<16x128xf32>, vector<120x128xf32> -> vector<120x128xf32>
    %56 = vector.shape_cast %55 : vector<120x128xf32> to vector<5x24x128xf32>
    %57 = vector.extract_strided_slice %56 {offsets = [0, 0, 0], sizes = [1, 24, 128], strides = [1, 1, 1]} : vector<5x24x128xf32> to vector<1x24x128xf32>
    %58 = vector.shape_cast %57 : vector<1x24x128xf32> to vector<24x128xf32>
    %59 = vector.extract_strided_slice %56 {offsets = [1, 0, 0], sizes = [1, 24, 128], strides = [1, 1, 1]} : vector<5x24x128xf32> to vector<1x24x128xf32>
    %60 = vector.shape_cast %59 : vector<1x24x128xf32> to vector<24x128xf32>
    %61 = vector.extract_strided_slice %56 {offsets = [2, 0, 0], sizes = [1, 24, 128], strides = [1, 1, 1]} : vector<5x24x128xf32> to vector<1x24x128xf32>
    %62 = vector.shape_cast %61 : vector<1x24x128xf32> to vector<24x128xf32>
    %63 = vector.extract_strided_slice %56 {offsets = [3, 0, 0], sizes = [1, 24, 128], strides = [1, 1, 1]} : vector<5x24x128xf32> to vector<1x24x128xf32>
    %64 = vector.shape_cast %63 : vector<1x24x128xf32> to vector<24x128xf32>
    %65 = vector.extract_strided_slice %56 {offsets = [4, 0, 0], sizes = [1, 24, 128], strides = [1, 1, 1]} : vector<5x24x128xf32> to vector<1x24x128xf32>
    %66 = vector.shape_cast %65 : vector<1x24x128xf32> to vector<24x128xf32>
    %67 = arith.mulf %58, %58 : vector<24x128xf32>
    %68 = arith.mulf %60, %60 : vector<24x128xf32>
    %69 = arith.mulf %58, %60 : vector<24x128xf32>
    %70 = arith.subf %62, %67 : vector<24x128xf32>
    %71 = arith.subf %64, %68 : vector<24x128xf32>
    %72 = arith.subf %66, %69 : vector<24x128xf32>
    %cst_21 = arith.constant 2.000000e+00 : f32
    %73 = vector.broadcast %cst_21 : f32 to vector<24x128xf32>
    %74 = arith.mulf %73, %72 : vector<24x128xf32>
    %75 = vector.broadcast %1 : f32 to vector<24x128xf32>
    %76 = arith.addf %74, %75 : vector<24x128xf32>
    %77 = arith.addf %70, %71 : vector<24x128xf32>
    %78 = vector.broadcast %1 : f32 to vector<24x128xf32>
    %79 = arith.addf %77, %78 : vector<24x128xf32>
    %cst_22 = arith.constant 2.000000e+00 : f32
    %80 = vector.broadcast %cst_22 : f32 to vector<24x128xf32>
    %81 = arith.mulf %80, %69 : vector<24x128xf32>
    %82 = vector.broadcast %0 : f32 to vector<24x128xf32>
    %83 = arith.addf %81, %82 : vector<24x128xf32>
    %84 = arith.mulf %83, %76 : vector<24x128xf32>
    %85 = arith.addf %67, %68 : vector<24x128xf32>
    %86 = vector.broadcast %0 : f32 to vector<24x128xf32>
    %87 = arith.addf %85, %86 : vector<24x128xf32>
    %88 = arith.mulf %87, %79 : vector<24x128xf32>
    %89 = arith.divf %84, %88 : vector<24x128xf32>
    %90 = tpu.iota {dimensions = array<i32: 1>} : vector<24x128xi32>
    %c6_i32 = arith.constant 6 : i32
    %91 = vector.broadcast %c6_i32 : i32 to vector<24x128xi32>
    %92 = arith.cmpi slt, %90, %91 : vector<24x128xi32>
    %cst_23 = arith.constant 0.000000e+00 : f32
    %93 = vector.broadcast %cst_23 : f32 to vector<24x128xf32>
    %94 = arith.select %92, %89, %93 : vector<24x128xi1>, vector<24x128xf32>
    %cst_24 = arith.constant dense<0.000000e+00> : vector<24xf32>
    %95 = vector.multi_reduction <add>, %94, %cst_24 [1] : vector<24x128xf32> to vector<24xf32>
    %96 = vector.shape_cast %95 : vector<24xf32> to vector<24x1xf32>
    %cst_25 = arith.constant dense<0.000000e+00> : vector<1xf32>
    %97 = vector.multi_reduction <add>, %96, %cst_25 [0] : vector<24x1xf32> to vector<1xf32>
    %98 = vector.shape_cast %97 : vector<1xf32> to vector<1x1xf32>
    %c0_26 = arith.constant 0 : index
    %c0_27 = arith.constant 0 : index
    %c0_28 = arith.constant 0 : index
    %99 = vector.load %arg5[%c0_26, %c0_27, %c0_28] : memref<1x1x1xf32, #tpu.memory_space<vmem>>, vector<1x1x1xf32>
    %100 = vector.shape_cast %99 : vector<1x1x1xf32> to vector<1x1xf32>
    %101 = vector.shape_cast %98 : vector<1x1xf32> to vector<1x1x1xf32>
    tpu.vector_store %arg5[%c0_26, %c0_27, %c0_28], %101 {strides = array<i32>} : memref<1x1x1xf32, #tpu.memory_space<vmem>>, vector<1x1x1xf32>,
    return
  }
  func.func @transform_0(%arg0: i32) -> i32 {
    %c0_i32 = arith.constant 0 : i32
    %c0_i32_0 = arith.constant 0 : i32
    return %c0_i32 : i32
  }
  func.func @transform_1(%arg0: i32) -> (i32, i32) {
    %c0_i32 = arith.constant 0 : i32
    %c0_i32_0 = arith.constant 0 : i32
    %c0_i32_1 = arith.constant 0 : i32
    return %c0_i32, %c0_i32_0 : i32, i32
  }
  func.func @transform_2(%arg0: i32) -> (i32, i32, i32, i32) {
    %c0_i32 = arith.constant 0 : i32
    %c0_i32_0 = arith.constant 0 : i32
    %c0_i32_1 = arith.constant 0 : i32
    %c0_i32_2 = arith.constant 0 : i32
    return %arg0, %c0_i32, %c0_i32_0, %c0_i32_1 : i32, i32, i32, i32
  }
  func.func @transform_3(%arg0: i32) -> (i32, i32, i32, i32) {
    %c0_i32 = arith.constant 0 : i32
    %c0_i32_0 = arith.constant 0 : i32
    %c0_i32_1 = arith.constant 0 : i32
    %c0_i32_2 = arith.constant 0 : i32
    return %arg0, %c0_i32, %c0_i32_0, %c0_i32_1 : i32, i32, i32, i32
  }
  func.func @transform_4(%arg0: i32) -> (i32, i32, i32) {
    %c0_i32 = arith.constant 0 : i32
    %c0_i32_0 = arith.constant 0 : i32
    %c0_i32_1 = arith.constant 0 : i32
    return %arg0, %c0_i32, %c0_i32_0 : i32, i32, i32
  }
}

</mosaic_0001>

<llo_original>
// kernel: tpu_custom_call.1
$region0: #{tpu_custom_call.1}
  #allocation0 [shape = 'u32[]', space=smem, size = 0x4, offset = 0x4, fixed_abs, tag = 'smem constant byte address 0x4 - core index']
  #allocation1 [shape = 'u32[72,128]{1,0:T(1,128)}', space=vmem, size = 0x9000, scoped, tag = 'internal scratch']
  %s0 = inlined_call_operand.hbm [shape: f32[2], index: 0, kind: input, shape index: {}]
  %s1 = inlined_call_operand.hbm [shape: f32[16,128], index: 1, kind: input, shape index: {}]
  %s2 = inlined_call_operand.hbm [shape: f32[2,4,16,16], index: 2, kind: input, shape index: {}]
  %s3 = inlined_call_operand.hbm [shape: f32[2,4,16,16], index: 3, kind: input, shape index: {}]
  %s4 = inlined_call_operand.vmem [shape: f32[2,1,1], index: 4, kind: output, shape index: {}]
  %s5 = sld [smem:[#allocation0]]
  $region65: #{tpu_custom_call.1} parent=0
    _
  %s7 = ssub.s32 1, %s5
  %s8 = scalar_select 0, %s7, %s5
  $region1: #{tpu_custom_call.1} parent=0
    #allocation2 [shape = 'u8[512]{0}', space=smem, size = 0x200, scoped, tag = 'input window, operand 0, single buffered']
    #allocation3 [shape = 's32[2]{0}', space=sflag, size = 0x8, scoped, tag = 'scoped memory for tpu_custom_call.1']
    #allocation4 [shape = 's32[2]{0}', space=sflag, size = 0x8, scoped, tag = 'scoped memory for tpu_custom_call.1']
    #allocation5 [shape = 'u8[8192]{0}', space=vmem, size = 0x2000, scoped, tag = 'input window, operand 1, single buffered']
    #allocation6 [shape = 'u8[65536]{0}', space=vmem, size = 0x10000, scoped, tag = 'input window, operand 2']
    #allocation7 [shape = 's32[2]{0}', space=sflag, size = 0x8, scoped, tag = 'scoped memory for tpu_custom_call.1']
    #allocation8 [shape = 'u8[65536]{0}', space=vmem, size = 0x10000, scoped, tag = 'input window, operand 3']
    %9 = vsyncpa [#allocation4], 0
    %10 = vsyncpa [#allocation3], 0
    %11 = vsyncpa [#allocation7], 0
    %s12 = scalar_lea.sflag [#allocation7], 1
    %13 = vsyncpa %s12, 0
    loop: start=0, step=1, limit=4
    $region2: #{tpu_custom_call.1} parent=1 // loop_pre_header
      _
    $region3: #{tpu_custom_call.1} parent=1 // loop_header
      %s15 = sphi 0, %s19
      %p16 = scmp.ge.s32.totalorder %s15, 4
      %s23 = sphi 0, %s23
      %s25 = sphi 0, %s23
      %s26 = sphi 0, %s25
      %s40 = sphi 0, %s26
      %s44 = sphi 0, %s44
      %s46 = sphi 0, %s44
      %s47 = sphi 0, %s46
      %s61 = sphi 0, %s47
      %s67 = sphi 0, %s69
      %s70 = sphi 0, %s67
      %s71 = sphi 0, %s70
      %s87 = sphi 0, %s71
      %s93 = sphi 0, %s95
      %s96 = sphi 0, %s93
      %s97 = sphi 0, %s96
      %s113 = sphi 0, %s97
      %s119 = sphi 0, %s121
      %s122 = sphi 0, %s119
      %s123 = sphi 0, %s122
      %s139 = sphi 0, %s123
    $region4: #{tpu_custom_call.1} parent=1 // loop_header_branch
      %18 = sbr.rel (%p16) target = $region8
    $region5: #{tpu_custom_call.1} parent=1 // loop_body
      %s20 = ssub.s32 %s15, 1
      %s21 = ssub.s32 %s15, 2
      %s22 = sadd.s32 %s15, 1
      %s24 = sadd.s32 %s23, 1
      %p27 = scmp.eq.s32.totalorder %s15, 1
      %p28 = scmp.ne.s32.totalorder %s23, %s25
      %p29 = scmp.eq.s32.totalorder %s15, 0
      %p30 = por %p28, %p29
      %p31 = scmp.ne.s32.totalorder %s23, %s25
      %p32 = scmp.eq.s32.totalorder %s20, 1
      %p33 = por %p31, %p32
      %p34 = scmp.ne.s32.totalorder %s25, %s26
      %p35 = scmp.eq.s32.totalorder %s20, 0
      %p36 = por %p34, %p35
      %p37 = scmp.ne.s32.totalorder %s25, %s26
      %p38 = scmp.eq.s32.totalorder %s21, 1
      %p39 = por %p37, %p38
      %p41 = scmp.ne.s32.totalorder %s26, %s40
      %p42 = scmp.eq.s32.totalorder %s21, 0
      %p43 = por %p41, %p42
      %s45 = sadd.s32 %s44, 1
      %p48 = scmp.eq.s32.totalorder %s15, 1
      %p49 = scmp.ne.s32.totalorder %s44, %s46
      %p50 = scmp.eq.s32.totalorder %s15, 0
      %p51 = por %p49, %p50
      %p52 = scmp.ne.s32.totalorder %s44, %s46
      %p53 = scmp.eq.s32.totalorder %s20, 1
      %p54 = por %p52, %p53
      %p55 = scmp.ne.s32.totalorder %s46, %s47
      %p56 = scmp.eq.s32.totalorder %s20, 0
      %p57 = por %p55, %p56
      %p58 = scmp.ne.s32.totalorder %s46, %s47
      %p59 = scmp.eq.s32.totalorder %s21, 1
      %p60 = por %p58, %p59
      %p62 = scmp.ne.s32.totalorder %s47, %s61
      %p63 = scmp.eq.s32.totalorder %s21, 0
      %p64 = por %p62, %p63
      %s65 = ssub.s32 %s15, %s22
      %p66 = scmp.eq.s32.totalorder %s65, 0
      %s68 = sadd.s32 %s67, 1
      %s69 = scalar_select %p66, %s67, %s68
      %p72 = pneg %p66
      %p73 = scmp.eq.s32.totalorder %s15, 1
      %p74 = por %p72, %p73
      %p75 = scmp.ne.s32.totalorder %s67, %s70
      %p76 = scmp.eq.s32.totalorder %s15, 0
      %p77 = por %p75, %p76
      %p78 = scmp.ne.s32.totalorder %s67, %s70
      %p79 = scmp.eq.s32.totalorder %s20, 1
      %p80 = por %p78, %p79
      %p81 = scmp.ne.s32.totalorder %s70, %s71
      %p82 = scmp.eq.s32.totalorder %s20, 0
      %p83 = por %p81, %p82
      %p84 = scmp.ne.s32.totalorder %s70, %s71
      %p85 = scmp.eq.s32.totalorder %s21, 1
      %p86 = por %p84, %p85
      %p88 = scmp.ne.s32.totalorder %s71, %s87
      %p89 = scmp.eq.s32.totalorder %s21, 0
      %p90 = por %p88, %p89
      %s91 = ssub.s32 %s15, %s22
      %p92 = scmp.eq.s32.totalorder %s91, 0
      %s94 = sadd.s32 %s93, 1
      %s95 = scalar_select %p92, %s93, %s94
      %p98 = pneg %p92
      %p99 = scmp.eq.s32.totalorder %s15, 1
      %p100 = por %p98, %p99
      %p101 = scmp.ne.s32.totalorder %s93, %s96
      %p102 = scmp.eq.s32.totalorder %s15, 0
      %p103 = por %p101, %p102
      %p104 = scmp.ne.s32.totalorder %s93, %s96
      %p105 = scmp.eq.s32.totalorder %s20, 1
      %p106 = por %p104, %p105
      %p107 = scmp.ne.s32.totalorder %s96, %s97
      %p108 = scmp.eq.s32.totalorder %s20, 0
      %p109 = por %p107, %p108
      %p110 = scmp.ne.s32.totalorder %s96, %s97
      %p111 = scmp.eq.s32.totalorder %s21, 1
      %p112 = por %p110, %p111
      %p114 = scmp.ne.s32.totalorder %s97, %s113
      %p115 = scmp.eq.s32.totalorder %s21, 0
      %p116 = por %p114, %p115
      %s117 = ssub.s32 %s15, %s22
      %p118 = scmp.eq.s32.totalorder %s117, 0
      %s120 = sadd.s32 %s119, 1
      %s121 = scalar_select %p118, %s119, %s120
      %p124 = pneg %p118
      %p125 = scmp.eq.s32.totalorder %s15, 1
      %p126 = por %p124, %p125
      %p127 = scmp.ne.s32.totalorder %s119, %s122
      %p128 = scmp.eq.s32.totalorder %s15, 0
      %p129 = por %p127, %p128
      %p130 = scmp.ne.s32.totalorder %s119, %s122
      %p131 = scmp.eq.s32.totalorder %s20, 1
      %p132 = por %p130, %p131
      %p133 = scmp.ne.s32.totalorder %s122, %s123
      %p134 = scmp.eq.s32.totalorder %s20, 0
      %p135 = por %p133, %p134
      %p136 = scmp.ne.s32.totalorder %s122, %s123
      %p137 = scmp.eq.s32.totalorder %s21, 1
      %p138 = por %p136, %p137
      %p140 = scmp.ne.s32.totalorder %s123, %s139
      %p141 = scmp.eq.s32.totalorder %s21, 0
      %p142 = por %p140, %p141
      %p143 = scmp.le.s32.totalorder 1, %s15
      %p144 = scmp.lt.s32.totalorder %s15, 3
      %p145 = pnand %p143, %p144
      %p146 = pneg %p145
      // Predicated region
      $region9: #{tpu_custom_call.1} parent=5 // pred_check
        _
      $region10: #{tpu_custom_call.1} parent=5 // pred_check_branch
        %148 = sbr.rel (%p145) target = $region12
      $region11: #{tpu_custom_call.1} parent=5 // pred_region
        %s149 = ssub.s32 %s15, 1
        // Predicated region
        $region13: #{tpu_custom_call.1} parent=11 // pred_check
          %p150 = pneg %p36
        $region14: #{tpu_custom_call.1} parent=11 // pred_check_branch
          %152 = sbr.rel (%p150) target = $region16
        $region15: #{tpu_custom_call.1} parent=11 // pred_region
          %154 = vsyncadd [#allocation4], 0
          %s156 = sshll.u32 %s0, 4
          %s157 = int_to_ptr.hbm [resolvable:$true] %s156
          %159 = dma.hbm_to_smem %s157, 16, [#allocation2], [#allocation4]
        $region16: #{tpu_custom_call.1} parent=11 // pred_fallthru
          _
        // Predicated region
        $region17: #{tpu_custom_call.1} parent=11 // pred_check
          %p160 = pneg %p57
        $region18: #{tpu_custom_call.1} parent=11 // pred_check_branch
          %162 = sbr.rel (%p160) target = $region20
        $region19: #{tpu_custom_call.1} parent=11 // pred_region
          %164 = vsyncadd [#allocation3], 0
          %s165 = sshll.u32 %s1, 4
          %s166 = int_to_ptr.hbm [resolvable:$true] %s165
          %s167 = sshll.u32 [#allocation5], 4
          %s168 = int_to_ptr.vmem [resolvable:$true] %s167
          %173 = dma.hbm_to_vmem [thread:$0]  %s166, 256, %s168, [#allocation3], 128, 128, 8
        $region20: #{tpu_custom_call.1} parent=11 // pred_fallthru
          _
      $region12: #{tpu_custom_call.1} parent=5 // pred_fallthru
        _
      %p174 = scmp.lt.s32.totalorder %s15, 2
      // Predicated region
      $region21: #{tpu_custom_call.1} parent=5 // pred_check
        %p175 = pneg %p174
      $region22: #{tpu_custom_call.1} parent=5 // pred_check_branch
        %177 = sbr.rel (%p175) target = $region24
      $region23: #{tpu_custom_call.1} parent=5 // pred_region
        // Predicated region
        $region25: #{tpu_custom_call.1} parent=23 // pred_check
          %p178 = pneg %p77
        $region26: #{tpu_custom_call.1} parent=23 // pred_check_branch
          %180 = sbr.rel (%p178) target = $region28
        $region27: #{tpu_custom_call.1} parent=23 // pred_region
          %s181 = sand.u32 %s15, 1
          %s182 = scalar_lea.sflag [#allocation7], %s181
          %s183 = sand.u32 %s67, 1
          %s184 = smul.addr %s183, 64
          %s185 = scalar_lea.vmem [#allocation6], %s184
          %187 = vsyncadd %s182, 0
          %s188 = smul.addr %s15, 8
          %s189 = smul.addr %s188, 8
          %s190 = scalar_lea.hbm %s2, %s189
          %s191 = sshll.u32 %s190, 4
          %s192 = int_to_ptr.hbm [resolvable:$true] %s191
          %s193 = sshll.u32 %s185, 4
          %s194 = int_to_ptr.vmem [resolvable:$true] %s193
          %199 = dma.hbm_to_vmem [thread:$0]  %s192, 1024, %s194, %s182, 128, 128, 8
        $region28: #{tpu_custom_call.1} parent=23 // pred_fallthru
          _
        // Predicated region
        $region29: #{tpu_custom_call.1} parent=23 // pred_check
          %p200 = pneg %p103
        $region30: #{tpu_custom_call.1} parent=23 // pred_check_branch
          %202 = sbr.rel (%p200) target = $region32
        $region31: #{tpu_custom_call.1} parent=23 // pred_region
          %s203 = sand.u32 %s15, 1
          %s204 = scalar_lea.sflag [#allocation7], %s203
          %s205 = sand.u32 %s93, 1
          %s206 = smul.addr %s205, 64
          %s207 = scalar_lea.vmem [#allocation8], %s206
          %209 = vsyncadd %s204, 0
          %s210 = smul.addr %s15, 8
          %s211 = smul.addr %s210, 8
          %s212 = scalar_lea.hbm %s3, %s211
          %s213 = sshll.u32 %s212, 4
          %s214 = int_to_ptr.hbm [resolvable:$true] %s213
          %s215 = sshll.u32 %s207, 4
          %s216 = int_to_ptr.vmem [resolvable:$true] %s215
          %221 = dma.hbm_to_vmem [thread:$0]  %s214, 1024, %s216, %s204, 128, 128, 8
        $region32: #{tpu_custom_call.1} parent=23 // pred_fallthru
          _
      $region24: #{tpu_custom_call.1} parent=5 // pred_fallthru
        _
      %p222 = scmp.le.s32.totalorder 1, %s15
      %p223 = scmp.lt.s32.totalorder %s15, 3
      %p224 = pnand %p222, %p223
      %p225 = pneg %p224
      // Predicated region
      $region33: #{tpu_custom_call.1} parent=5 // pred_check
        _
      $region34: #{tpu_custom_call.1} parent=5 // pred_check_branch
        %227 = sbr.rel (%p224) target = $region36
      $region35: #{tpu_custom_call.1} parent=5 // pred_region
        %s228 = ssub.s32 %s15, 1
        // Predicated region
        $region37: #{tpu_custom_call.1} parent=35 // pred_check
          %p229 = pneg %p36
        $region38: #{tpu_custom_call.1} parent=35 // pred_check_branch
          %231 = sbr.rel (%p229) target = $region40
        $region39: #{tpu_custom_call.1} parent=35 // pred_region
          %233 = dma.done [#allocation4], 16
        $region40: #{tpu_custom_call.1} parent=35 // pred_fallthru
          _
        // Predicated region
        $region41: #{tpu_custom_call.1} parent=35 // pred_check
          %p234 = pneg %p57
        $region42: #{tpu_custom_call.1} parent=35 // pred_check_branch
          %236 = sbr.rel (%p234) target = $region44
        $region43: #{tpu_custom_call.1} parent=35 // pred_region
          %238 = dma.done [#allocation3], 256
        $region44: #{tpu_custom_call.1} parent=35 // pred_fallthru
          _
        %s239 = sand.u32 %s20, 1
        %s240 = scalar_lea.sflag [#allocation7], %s239
        %s241 = sand.u32 %s70, 1
        %s242 = smul.addr %s241, 64
        %s243 = scalar_lea.vmem [#allocation6], %s242
        // Predicated region
        $region45: #{tpu_custom_call.1} parent=35 // pred_check
          %p244 = pneg %p83
        $region46: #{tpu_custom_call.1} parent=35 // pred_check_branch
          %246 = sbr.rel (%p244) target = $region48
        $region47: #{tpu_custom_call.1} parent=35 // pred_region
          %248 = dma.done %s240, 1024
        $region48: #{tpu_custom_call.1} parent=35 // pred_fallthru
          _
        %s249 = sand.u32 %s20, 1
        %s250 = scalar_lea.sflag [#allocation7], %s249
        %s251 = sand.u32 %s96, 1
        %s252 = smul.addr %s251, 64
        %s253 = scalar_lea.vmem [#allocation8], %s252
        // Predicated region
        $region49: #{tpu_custom_call.1} parent=35 // pred_check
          %p254 = pneg %p109
        $region50: #{tpu_custom_call.1} parent=35 // pred_check_branch
          %256 = sbr.rel (%p254) target = $region52
        $region51: #{tpu_custom_call.1} parent=35 // pred_region
          %258 = dma.done %s250, 1024
        $region52: #{tpu_custom_call.1} parent=35 // pred_fallthru
          _
        %259 = sfence
        %p260 = pneg %p36
        %p261 = pneg %p33
        %p262 = pneg %p57
        %p263 = pneg %p54
        %s264 = sand.u32 %s20, 1
        %s265 = scalar_lea.sflag [#allocation7], %s264
        %s266 = sand.u32 %s70, 1
        %s267 = smul.addr %s266, 64
        %s268 = scalar_lea.vmem [#allocation6], %s267
        %p269 = pneg %p83
        %p270 = pneg %p80
        %s271 = sand.u32 %s20, 1
        %s272 = scalar_lea.sflag [#allocation7], %s271
        %s273 = sand.u32 %s96, 1
        %s274 = smul.addr %s273, 64
        %s275 = scalar_lea.vmem [#allocation8], %s274
        %p276 = pneg %p109
        %p277 = pneg %p106
        %p278 = pneg %p135
        %p279 = pneg %p132
        %p280 = scmp.lt.s32.totalorder %s20, 1
        %s281 = scalar_select %p280, %s20, 1
        %s282 = scalar_lea.vmem %s4, %s281
        %p283 = scmp.lt.s32.totalorder %s20, 1
        %s284 = scalar_select %p283, %s20, 1
        %s285 = scalar_lea.vmem %s4, %s284
        %s286 = sld [smem:[#allocation2]]
        %s287 = sld [smem:[#allocation2 + $0x1]]
        %v288 = vld [vmem:[%s243] sm:$0xff]
        %v289 = vld [vmem:[%s243 + $0x8] sm:$0xff]
        %v290 = vld [vmem:[%s243 + $0x10] sm:$0xff]
        %v291 = vld [vmem:[%s243 + $0x18] sm:$0xff]
        %v292 = vld [vmem:[%s243 + $0x20] sm:$0xff]
        %v293 = vld [vmem:[%s243 + $0x28] sm:$0xff]
        %v294 = vld [vmem:[%s243 + $0x30] sm:$0xff]
        %v295 = vld [vmem:[%s243 + $0x38] sm:$0xff]
        %v296 = vld [vmem:[%s253] sm:$0xff]
        %v297 = vld [vmem:[%s253 + $0x8] sm:$0xff]
        %v298 = vld [vmem:[%s253 + $0x10] sm:$0xff]
        %v299 = vld [vmem:[%s253 + $0x18] sm:$0xff]
        %v300 = vld [vmem:[%s253 + $0x20] sm:$0xff]
        %v301 = vld [vmem:[%s253 + $0x28] sm:$0xff]
        %v302 = vld [vmem:[%s253 + $0x30] sm:$0xff]
        %v303 = vld [vmem:[%s253 + $0x38] sm:$0xff]
        %v304 = vmul.f32 %v288, %v288
        %v305 = vmul.f32 %v289, %v289
        %v306 = vmul.f32 %v290, %v290
        %v307 = vmul.f32 %v291, %v291
        %v308 = vmul.f32 %v292, %v292
        %v309 = vmul.f32 %v293, %v293
        %v310 = vmul.f32 %v294, %v294
        %v311 = vmul.f32 %v295, %v295
        %v312 = vmul.f32 %v296, %v296
        %v313 = vmul.f32 %v297, %v297
        %v314 = vmul.f32 %v298, %v298
        %v315 = vmul.f32 %v299, %v299
        %v316 = vmul.f32 %v300, %v300
        %v317 = vmul.f32 %v301, %v301
        %v318 = vmul.f32 %v302, %v302
        %v319 = vmul.f32 %v303, %v303
        %v320 = vmul.f32 %v288, %v296
        %v321 = vmul.f32 %v289, %v297
        %v322 = vmul.f32 %v290, %v298
        %v323 = vmul.f32 %v291, %v299
        %v324 = vmul.f32 %v292, %v300
        %v325 = vmul.f32 %v293, %v301
        %v326 = vmul.f32 %v294, %v302
        %v327 = vmul.f32 %v295, %v303
        %v328 = vmul.f32 %v288, 0.0010283801
        %v329 = vmul.f32 %v290, 0.0010283801
        %v330 = vmul.f32 %v292, 0.0010283801
        %v331 = vmul.f32 %v294, 0.0010283801
        %v332 = vmul.f32 %v296, 0.0010283801
        %v333 = vmul.f32 %v298, 0.0010283801
        %v334 = vmul.f32 %v300, 0.0010283801
        %v335 = vmul.f32 %v302, 0.0010283801
        %v336 = vmul.f32 %v304, 0.0010283801
        %v337 = vmul.f32 %v306, 0.0010283801
        %v338 = vmul.f32 %v308, 0.0010283801
        %v339 = vmul.f32 %v310, 0.0010283801
        %v340 = vmul.f32 %v312, 0.0010283801
        %v341 = vmul.f32 %v314, 0.0010283801
        %v342 = vmul.f32 %v316, 0.0010283801
        %v343 = vmul.f32 %v318, 0.0010283801
        %v344 = vmul.f32 %v320, 0.0010283801
        %v345 = vmul.f32 %v322, 0.0010283801
        %v346 = vmul.f32 %v324, 0.0010283801
        %v347 = vmul.f32 %v326, 0.0010283801
        %v348 = vmul.f32 %v288, 0.007598758
        %v349 = vmul.f32 %v290, 0.007598758
        %v350 = vmul.f32 %v292, 0.007598758
        %v351 = vmul.f32 %v294, 0.007598758
        %v352 = vmul.f32 %v296, 0.007598758
        %v353 = vmul.f32 %v298, 0.007598758
        %v354 = vmul.f32 %v300, 0.007598758
        %v355 = vmul.f32 %v302, 0.007598758
        %v356 = vmul.f32 %v304, 0.007598758
        %v357 = vmul.f32 %v306, 0.007598758
        %v358 = vmul.f32 %v308, 0.007598758
        %v359 = vmul.f32 %v310, 0.007598758
        %v360 = vmul.f32 %v312, 0.007598758
        %v361 = vmul.f32 %v314, 0.007598758
        %v362 = vmul.f32 %v316, 0.007598758
        %v363 = vmul.f32 %v318, 0.007598758
        %v364 = vmul.f32 %v320, 0.007598758
        %v365 = vmul.f32 %v322, 0.007598758
        %v366 = vmul.f32 %v324, 0.007598758
        %v367 = vmul.f32 %v326, 0.007598758
        %v388 = vrot.slane %v348, 1
        %v389 = vrot.slane %v349, 1
        %v390 = vrot.slane %v350, 1
        %v391 = vrot.slane %v351, 1
        %v392 = vrot.slane %v352, 1
        %v393 = vrot.slane %v353, 1
        %v394 = vrot.slane %v354, 1
        %v395 = vrot.slane %v355, 1
        %v396 = vrot.slane %v356, 1
        %v397 = vrot.slane %v357, 1
        %v398 = vrot.slane %v358, 1
        %v399 = vrot.slane %v359, 1
        %v400 = vrot.slane %v360, 1
        %v401 = vrot.slane %v361, 1
        %v402 = vrot.slane %v362, 1
        %v403 = vrot.slane %v363, 1
        %v404 = vrot.slane %v364, 1
        %v405 = vrot.slane %v365, 1
        %v406 = vrot.slane %v366, 1
        %v407 = vrot.slane %v367, 1
        %v428 = vadd.f32 %v328, %v388
        %v429 = vadd.f32 %v329, %v389
        %v430 = vadd.f32 %v330, %v390
        %v431 = vadd.f32 %v331, %v391
        %v432 = vadd.f32 %v332, %v392
        %v433 = vadd.f32 %v333, %v393
        %v434 = vadd.f32 %v334, %v394
        %v435 = vadd.f32 %v335, %v395
        %v436 = vadd.f32 %v336, %v396
        %v437 = vadd.f32 %v337, %v397
        %v438 = vadd.f32 %v338, %v398
        %v439 = vadd.f32 %v339, %v399
        %v440 = vadd.f32 %v340, %v400
        %v441 = vadd.f32 %v341, %v401
        %v442 = vadd.f32 %v342, %v402
        %v443 = vadd.f32 %v343, %v403
        %v444 = vadd.f32 %v344, %v404
        %v445 = vadd.f32 %v345, %v405
        %v446 = vadd.f32 %v346, %v406
        %v447 = vadd.f32 %v347, %v407
        %v448 = vmul.f32 %v288, 0.036000773
        %v449 = vmul.f32 %v290, 0.036000773
        %v450 = vmul.f32 %v292, 0.036000773
        %v451 = vmul.f32 %v294, 0.036000773
        %v452 = vmul.f32 %v296, 0.036000773
        %v453 = vmul.f32 %v298, 0.036000773
        %v454 = vmul.f32 %v300, 0.036000773
        %v455 = vmul.f32 %v302, 0.036000773
        %v456 = vmul.f32 %v304, 0.036000773
        %v457 = vmul.f32 %v306, 0.036000773
        %v458 = vmul.f32 %v308, 0.036000773
        %v459 = vmul.f32 %v310, 0.036000773
        %v460 = vmul.f32 %v312, 0.036000773
        %v461 = vmul.f32 %v314, 0.036000773
        %v462 = vmul.f32 %v316, 0.036000773
        %v463 = vmul.f32 %v318, 0.036000773
        %v464 = vmul.f32 %v320, 0.036000773
        %v465 = vmul.f32 %v322, 0.036000773
        %v466 = vmul.f32 %v324, 0.036000773
        %v467 = vmul.f32 %v326, 0.036000773
        %v488 = vrot.slane %v448, 2
        %v489 = vrot.slane %v449, 2
        %v490 = vrot.slane %v450, 2
        %v491 = vrot.slane %v451, 2
        %v492 = vrot.slane %v452, 2
        %v493 = vrot.slane %v453, 2
        %v494 = vrot.slane %v454, 2
        %v495 = vrot.slane %v455, 2
        %v496 = vrot.slane %v456, 2
        %v497 = vrot.slane %v457, 2
        %v498 = vrot.slane %v458, 2
        %v499 = vrot.slane %v459, 2
        %v500 = vrot.slane %v460, 2
        %v501 = vrot.slane %v461, 2
        %v502 = vrot.slane %v462, 2
        %v503 = vrot.slane %v463, 2
        %v504 = vrot.slane %v464, 2
        %v505 = vrot.slane %v465, 2
        %v506 = vrot.slane %v466, 2
        %v507 = vrot.slane %v467, 2
        %v528 = vadd.f32 %v428, %v488
        %v529 = vadd.f32 %v429, %v489
        %v530 = vadd.f32 %v430, %v490
        %v531 = vadd.f32 %v431, %v491
        %v532 = vadd.f32 %v432, %v492
        %v533 = vadd.f32 %v433, %v493
        %v534 = vadd.f32 %v434, %v494
        %v535 = vadd.f32 %v435, %v495
        %v536 = vadd.f32 %v436, %v496
        %v537 = vadd.f32 %v437, %v497
        %v538 = vadd.f32 %v438, %v498
        %v539 = vadd.f32 %v439, %v499
        %v540 = vadd.f32 %v440, %v500
        %v541 = vadd.f32 %v441, %v501
        %v542 = vadd.f32 %v442, %v502
        %v543 = vadd.f32 %v443, %v503
        %v544 = vadd.f32 %v444, %v504
        %v545 = vadd.f32 %v445, %v505
        %v546 = vadd.f32 %v446, %v506
        %v547 = vadd.f32 %v447, %v507
        %v548 = vmul.f32 %v288, 0.10936069
        %v549 = vmul.f32 %v289, 0.10936069
        %v550 = vmul.f32 %v290, 0.10936069
        %v551 = vmul.f32 %v291, 0.10936069
        %v552 = vmul.f32 %v292, 0.10936069
        %v553 = vmul.f32 %v293, 0.10936069
        %v554 = vmul.f32 %v294, 0.10936069
        %v555 = vmul.f32 %v295, 0.10936069
        %v556 = vmul.f32 %v296, 0.10936069
        %v557 = vmul.f32 %v297, 0.10936069
        %v558 = vmul.f32 %v298, 0.10936069
        %v559 = vmul.f32 %v299, 0.10936069
        %v560 = vmul.f32 %v300, 0.10936069
        %v561 = vmul.f32 %v301, 0.10936069
        %v562 = vmul.f32 %v302, 0.10936069
        %v563 = vmul.f32 %v303, 0.10936069
        %v564 = vmul.f32 %v304, 0.10936069
        %v565 = vmul.f32 %v305, 0.10936069
        %v566 = vmul.f32 %v306, 0.10936069
        %v567 = vmul.f32 %v307, 0.10936069
        %v568 = vmul.f32 %v308, 0.10936069
        %v569 = vmul.f32 %v309, 0.10936069
        %v570 = vmul.f32 %v310, 0.10936069
        %v571 = vmul.f32 %v311, 0.10936069
        %v572 = vmul.f32 %v312, 0.10936069
        %v573 = vmul.f32 %v313, 0.10936069
        %v574 = vmul.f32 %v314, 0.10936069
        %v575 = vmul.f32 %v315, 0.10936069
        %v576 = vmul.f32 %v316, 0.10936069
        %v577 = vmul.f32 %v317, 0.10936069
        %v578 = vmul.f32 %v318, 0.10936069
        %v579 = vmul.f32 %v319, 0.10936069
        %v580 = vmul.f32 %v320, 0.10936069
        %v581 = vmul.f32 %v321, 0.10936069
        %v582 = vmul.f32 %v322, 0.10936069
        %v583 = vmul.f32 %v323, 0.10936069
        %v584 = vmul.f32 %v324, 0.10936069
        %v585 = vmul.f32 %v325, 0.10936069
        %v586 = vmul.f32 %v326, 0.10936069
        %v587 = vmul.f32 %v327, 0.10936069
        %vm628 = vcmask 1044480
        %v629 = vrot.slane %v548, 3
        %v630 = vrot.slane %v549, 3
        %v631 = vsel %vm628, %v629, %v630
        %v632 = vrot.slane %v550, 3
        %v633 = vrot.slane %v551, 3
        %v634 = vsel %vm628, %v632, %v633
        %v635 = vrot.slane %v552, 3
        %v636 = vrot.slane %v553, 3
        %v637 = vsel %vm628, %v635, %v636
        %v638 = vrot.slane %v554, 3
        %v639 = vrot.slane %v555, 3
        %v640 = vsel %vm628, %v638, %v639
        %v641 = vrot.slane %v556, 3
        %v642 = vrot.slane %v557, 3
        %v643 = vsel %vm628, %v641, %v642
        %v644 = vrot.slane %v558, 3
        %v645 = vrot.slane %v559, 3
        %v646 = vsel %vm628, %v644, %v645
        %v647 = vrot.slane %v560, 3
        %v648 = vrot.slane %v561, 3
        %v649 = vsel %vm628, %v647, %v648
        %v650 = vrot.slane %v562, 3
        %v651 = vrot.slane %v563, 3
        %v652 = vsel %vm628, %v650, %v651
        %v653 = vrot.slane %v564, 3
        %v654 = vrot.slane %v565, 3
        %v655 = vsel %vm628, %v653, %v654
        %v656 = vrot.slane %v566, 3
        %v657 = vrot.slane %v567, 3
        %v658 = vsel %vm628, %v656, %v657
        %v659 = vrot.slane %v568, 3
        %v660 = vrot.slane %v569, 3
        %v661 = vsel %vm628, %v659, %v660
        %v662 = vrot.slane %v570, 3
        %v663 = vrot.slane %v571, 3
        %v664 = vsel %vm628, %v662, %v663
        %v665 = vrot.slane %v572, 3
        %v666 = vrot.slane %v573, 3
        %v667 = vsel %vm628, %v665, %v666
        %v668 = vrot.slane %v574, 3
        %v669 = vrot.slane %v575, 3
        %v670 = vsel %vm628, %v668, %v669
        %v671 = vrot.slane %v576, 3
        %v672 = vrot.slane %v577, 3
        %v673 = vsel %vm628, %v671, %v672
        %v674 = vrot.slane %v578, 3
        %v675 = vrot.slane %v579, 3
        %v676 = vsel %vm628, %v674, %v675
        %v677 = vrot.slane %v580, 3
        %v678 = vrot.slane %v581, 3
        %v679 = vsel %vm628, %v677, %v678
        %v680 = vrot.slane %v582, 3
        %v681 = vrot.slane %v583, 3
        %v682 = vsel %vm628, %v680, %v681
        %v683 = vrot.slane %v584, 3
        %v684 = vrot.slane %v585, 3
        %v685 = vsel %vm628, %v683, %v684
        %v686 = vrot.slane %v586, 3
        %v687 = vrot.slane %v587, 3
        %v688 = vsel %vm628, %v686, %v687
        %v709 = vadd.f32 %v528, %v631
        %v710 = vadd.f32 %v529, %v634
        %v711 = vadd.f32 %v530, %v637
        %v712 = vadd.f32 %v531, %v640
        %v713 = vadd.f32 %v532, %v643
        %v714 = vadd.f32 %v533, %v646
        %v715 = vadd.f32 %v534, %v649
        %v716 = vadd.f32 %v535, %v652
        %v717 = vadd.f32 %v536, %v655
        %v718 = vadd.f32 %v537, %v658
        %v719 = vadd.f32 %v538, %v661
        %v720 = vadd.f32 %v539, %v664
        %v721 = vadd.f32 %v540, %v667
        %v722 = vadd.f32 %v541, %v670
        %v723 = vadd.f32 %v542, %v673
        %v724 = vadd.f32 %v543, %v676
        %v725 = vadd.f32 %v544, %v679
        %v726 = vadd.f32 %v545, %v682
        %v727 = vadd.f32 %v546, %v685
        %v728 = vadd.f32 %v547, %v688
        %v729 = vmul.f32 %v288, 0.21300554
        %v730 = vmul.f32 %v289, 0.21300554
        %v731 = vmul.f32 %v290, 0.21300554
        %v732 = vmul.f32 %v291, 0.21300554
        %v733 = vmul.f32 %v292, 0.21300554
        %v734 = vmul.f32 %v293, 0.21300554
        %v735 = vmul.f32 %v294, 0.21300554
        %v736 = vmul.f32 %v295, 0.21300554
        %v737 = vmul.f32 %v296, 0.21300554
        %v738 = vmul.f32 %v297, 0.21300554
        %v739 = vmul.f32 %v298, 0.21300554
        %v740 = vmul.f32 %v299, 0.21300554
        %v741 = vmul.f32 %v300, 0.21300554
        %v742 = vmul.f32 %v301, 0.21300554
        %v743 = vmul.f32 %v302, 0.21300554
        %v744 = vmul.f32 %v303, 0.21300554
        %v745 = vmul.f32 %v304, 0.21300554
        %v746 = vmul.f32 %v305, 0.21300554
        %v747 = vmul.f32 %v306, 0.21300554
        %v748 = vmul.f32 %v307, 0.21300554
        %v749 = vmul.f32 %v308, 0.21300554
        %v750 = vmul.f32 %v309, 0.21300554
        %v751 = vmul.f32 %v310, 0.21300554
        %v752 = vmul.f32 %v311, 0.21300554
        %v753 = vmul.f32 %v312, 0.21300554
        %v754 = vmul.f32 %v313, 0.21300554
        %v755 = vmul.f32 %v314, 0.21300554
        %v756 = vmul.f32 %v315, 0.21300554
        %v757 = vmul.f32 %v316, 0.21300554
        %v758 = vmul.f32 %v317, 0.21300554
        %v759 = vmul.f32 %v318, 0.21300554
        %v760 = vmul.f32 %v319, 0.21300554
        %v761 = vmul.f32 %v320, 0.21300554
        %v762 = vmul.f32 %v321, 0.21300554
        %v763 = vmul.f32 %v322, 0.21300554
        %v764 = vmul.f32 %v323, 0.21300554
        %v765 = vmul.f32 %v324, 0.21300554
        %v766 = vmul.f32 %v325, 0.21300554
        %v767 = vmul.f32 %v326, 0.21300554
        %v768 = vmul.f32 %v327, 0.21300554
        %vm809 = vcmask 1043456
        %v810 = vrot.slane %v729, 4
        %v811 = vrot.slane %v730, 4
        %v812 = vsel %vm809, %v810, %v811
        %v813 = vrot.slane %v731, 4
        %v814 = vrot.slane %v732, 4
        %v815 = vsel %vm809, %v813, %v814
        %v816 = vrot.slane %v733, 4
        %v817 = vrot.slane %v734, 4
        %v818 = vsel %vm809, %v816, %v817
        %v819 = vrot.slane %v735, 4
        %v820 = vrot.slane %v736, 4
        %v821 = vsel %vm809, %v819, %v820
        %v822 = vrot.slane %v737, 4
        %v823 = vrot.slane %v738, 4
        %v824 = vsel %vm809, %v822, %v823
        %v825 = vrot.slane %v739, 4
        %v826 = vrot.slane %v740, 4
        %v827 = vsel %vm809, %v825, %v826
        %v828 = vrot.slane %v741, 4
        %v829 = vrot.slane %v742, 4
        %v830 = vsel %vm809, %v828, %v829
        %v831 = vrot.slane %v743, 4
        %v832 = vrot.slane %v744, 4
        %v833 = vsel %vm809, %v831, %v832
        %v834 = vrot.slane %v745, 4
        %v835 = vrot.slane %v746, 4
        %v836 = vsel %vm809, %v834, %v835
        %v837 = vrot.slane %v747, 4
        %v838 = vrot.slane %v748, 4
        %v839 = vsel %vm809, %v837, %v838
        %v840 = vrot.slane %v749, 4
        %v841 = vrot.slane %v750, 4
        %v842 = vsel %vm809, %v840, %v841
        %v843 = vrot.slane %v751, 4
        %v844 = vrot.slane %v752, 4
        %v845 = vsel %vm809, %v843, %v844
        %v846 = vrot.slane %v753, 4
        %v847 = vrot.slane %v754, 4
        %v848 = vsel %vm809, %v846, %v847
        %v849 = vrot.slane %v755, 4
        %v850 = vrot.slane %v756, 4
        %v851 = vsel %vm809, %v849, %v850
        %v852 = vrot.slane %v757, 4
        %v853 = vrot.slane %v758, 4
        %v854 = vsel %vm809, %v852, %v853
        %v855 = vrot.slane %v759, 4
        %v856 = vrot.slane %v760, 4
        %v857 = vsel %vm809, %v855, %v856
        %v858 = vrot.slane %v761, 4
        %v859 = vrot.slane %v762, 4
        %v860 = vsel %vm809, %v858, %v859
        %v861 = vrot.slane %v763, 4
        %v862 = vrot.slane %v764, 4
        %v863 = vsel %vm809, %v861, %v862
        %v864 = vrot.slane %v765, 4
        %v865 = vrot.slane %v766, 4
        %v866 = vsel %vm809, %v864, %v865
        %v867 = vrot.slane %v767, 4
        %v868 = vrot.slane %v768, 4
        %v869 = vsel %vm809, %v867, %v868
        %v890 = vadd.f32 %v709, %v812
        %v891 = vadd.f32 %v710, %v815
        %v892 = vadd.f32 %v711, %v818
        %v893 = vadd.f32 %v712, %v821
        %v894 = vadd.f32 %v713, %v824
        %v895 = vadd.f32 %v714, %v827
        %v896 = vadd.f32 %v715, %v830
        %v897 = vadd.f32 %v716, %v833
        %v898 = vadd.f32 %v717, %v836
        %v899 = vadd.f32 %v718, %v839
        %v900 = vadd.f32 %v719, %v842
        %v901 = vadd.f32 %v720, %v845
        %v902 = vadd.f32 %v721, %v848
        %v903 = vadd.f32 %v722, %v851
        %v904 = vadd.f32 %v723, %v854
        %v905 = vadd.f32 %v724, %v857
        %v906 = vadd.f32 %v725, %v860
        %v907 = vadd.f32 %v726, %v863
        %v908 = vadd.f32 %v727, %v866
        %v909 = vadd.f32 %v728, %v869
        %v910 = vmul.f32 %v288, 0.26601171
        %v911 = vmul.f32 %v289, 0.26601171
        %v912 = vmul.f32 %v290, 0.26601171
        %v913 = vmul.f32 %v291, 0.26601171
        %v914 = vmul.f32 %v292, 0.26601171
        %v915 = vmul.f32 %v293, 0.26601171
        %v916 = vmul.f32 %v294, 0.26601171
        %v917 = vmul.f32 %v295, 0.26601171
        %v918 = vmul.f32 %v296, 0.26601171
        %v919 = vmul.f32 %v297, 0.26601171
        %v920 = vmul.f32 %v298, 0.26601171
        %v921 = vmul.f32 %v299, 0.26601171
        %v922 = vmul.f32 %v300, 0.26601171
        %v923 = vmul.f32 %v301, 0.26601171
        %v924 = vmul.f32 %v302, 0.26601171
        %v925 = vmul.f32 %v303, 0.26601171
        %v926 = vmul.f32 %v304, 0.26601171
        %v927 = vmul.f32 %v305, 0.26601171
        %v928 = vmul.f32 %v306, 0.26601171
        %v929 = vmul.f32 %v307, 0.26601171
        %v930 = vmul.f32 %v308, 0.26601171
        %v931 = vmul.f32 %v309, 0.26601171
        %v932 = vmul.f32 %v310, 0.26601171
        %v933 = vmul.f32 %v311, 0.26601171
        %v934 = vmul.f32 %v312, 0.26601171
        %v935 = vmul.f32 %v313, 0.26601171
        %v936 = vmul.f32 %v314, 0.26601171
        %v937 = vmul.f32 %v315, 0.26601171
        %v938 = vmul.f32 %v316, 0.26601171
        %v939 = vmul.f32 %v317, 0.26601171
        %v940 = vmul.f32 %v318, 0.26601171
        %v941 = vmul.f32 %v319, 0.26601171
        %v942 = vmul.f32 %v320, 0.26601171
        %v943 = vmul.f32 %v321, 0.26601171
        %v944 = vmul.f32 %v322, 0.26601171
        %v945 = vmul.f32 %v323, 0.26601171
        %v946 = vmul.f32 %v324, 0.26601171
        %v947 = vmul.f32 %v325, 0.26601171
        %v948 = vmul.f32 %v326, 0.26601171
        %v949 = vmul.f32 %v327, 0.26601171
        %vm990 = vcmask 1042432
        %v991 = vrot.slane %v910, 5
        %v992 = vrot.slane %v911, 5
        %v993 = vsel %vm990, %v991, %v992
        %v994 = vrot.slane %v912, 5
        %v995 = vrot.slane %v913, 5
        %v996 = vsel %vm990, %v994, %v995
        %v997 = vrot.slane %v914, 5
        %v998 = vrot.slane %v915, 5
        %v999 = vsel %vm990, %v997, %v998
        %v1000 = vrot.slane %v916, 5
        %v1001 = vrot.slane %v917, 5
        %v1002 = vsel %vm990, %v1000, %v1001
        %v1003 = vrot.slane %v918, 5
        %v1004 = vrot.slane %v919, 5
        %v1005 = vsel %vm990, %v1003, %v1004
        %v1006 = vrot.slane %v920, 5
        %v1007 = vrot.slane %v921, 5
        %v1008 = vsel %vm990, %v1006, %v1007
        %v1009 = vrot.slane %v922, 5
        %v1010 = vrot.slane %v923, 5
        %v1011 = vsel %vm990, %v1009, %v1010
        %v1012 = vrot.slane %v924, 5
        %v1013 = vrot.slane %v925, 5
        %v1014 = vsel %vm990, %v1012, %v1013
        %v1015 = vrot.slane %v926, 5
        %v1016 = vrot.slane %v927, 5
        %v1017 = vsel %vm990, %v1015, %v1016
        %v1018 = vrot.slane %v928, 5
        %v1019 = vrot.slane %v929, 5
        %v1020 = vsel %vm990, %v1018, %v1019
        %v1021 = vrot.slane %v930, 5
        %v1022 = vrot.slane %v931, 5
        %v1023 = vsel %vm990, %v1021, %v1022
        %v1024 = vrot.slane %v932, 5
        %v1025 = vrot.slane %v933, 5
        %v1026 = vsel %vm990, %v1024, %v1025
        %v1027 = vrot.slane %v934, 5
        %v1028 = vrot.slane %v935, 5
        %v1029 = vsel %vm990, %v1027, %v1028
        %v1030 = vrot.slane %v936, 5
        %v1031 = vrot.slane %v937, 5
        %v1032 = vsel %vm990, %v1030, %v1031
        %v1033 = vrot.slane %v938, 5
        %v1034 = vrot.slane %v939, 5
        %v1035 = vsel %vm990, %v1033, %v1034
        %v1036 = vrot.slane %v940, 5
        %v1037 = vrot.slane %v941, 5
        %v1038 = vsel %vm990, %v1036, %v1037
        %v1039 = vrot.slane %v942, 5
        %v1040 = vrot.slane %v943, 5
        %v1041 = vsel %vm990, %v1039, %v1040
        %v1042 = vrot.slane %v944, 5
        %v1043 = vrot.slane %v945, 5
        %v1044 = vsel %vm990, %v1042, %v1043
        %v1045 = vrot.slane %v946, 5
        %v1046 = vrot.slane %v947, 5
        %v1047 = vsel %vm990, %v1045, %v1046
        %v1048 = vrot.slane %v948, 5
        %v1049 = vrot.slane %v949, 5
        %v1050 = vsel %vm990, %v1048, %v1049
        %v1071 = vadd.f32 %v890, %v993
        %v1072 = vadd.f32 %v891, %v996
        %v1073 = vadd.f32 %v892, %v999
        %v1074 = vadd.f32 %v893, %v1002
        %v1075 = vadd.f32 %v894, %v1005
        %v1076 = vadd.f32 %v895, %v1008
        %v1077 = vadd.f32 %v896, %v1011
        %v1078 = vadd.f32 %v897, %v1014
        %v1079 = vadd.f32 %v898, %v1017
        %v1080 = vadd.f32 %v899, %v1020
        %v1081 = vadd.f32 %v900, %v1023
        %v1082 = vadd.f32 %v901, %v1026
        %v1083 = vadd.f32 %v902, %v1029
        %v1084 = vadd.f32 %v903, %v1032
        %v1085 = vadd.f32 %v904, %v1035
        %v1086 = vadd.f32 %v905, %v1038
        %v1087 = vadd.f32 %v906, %v1041
        %v1088 = vadd.f32 %v907, %v1044
        %v1089 = vadd.f32 %v908, %v1047
        %v1090 = vadd.f32 %v909, %v1050
        %vm1091 = vcmask 1041408
        %v1092 = vrot.slane %v729, 6
        %v1093 = vrot.slane %v730, 6
        %v1094 = vsel %vm1091, %v1092, %v1093
        %v1095 = vrot.slane %v731, 6
        %v1096 = vrot.slane %v732, 6
        %v1097 = vsel %vm1091, %v1095, %v1096
        %v1098 = vrot.slane %v733, 6
        %v1099 = vrot.slane %v734, 6
        %v1100 = vsel %vm1091, %v1098, %v1099
        %v1101 = vrot.slane %v735, 6
        %v1102 = vrot.slane %v736, 6
        %v1103 = vsel %vm1091, %v1101, %v1102
        %v1104 = vrot.slane %v737, 6
        %v1105 = vrot.slane %v738, 6
        %v1106 = vsel %vm1091, %v1104, %v1105
        %v1107 = vrot.slane %v739, 6
        %v1108 = vrot.slane %v740, 6
        %v1109 = vsel %vm1091, %v1107, %v1108
        %v1110 = vrot.slane %v741, 6
        %v1111 = vrot.slane %v742, 6
        %v1112 = vsel %vm1091, %v1110, %v1111
        %v1113 = vrot.slane %v743, 6
        %v1114 = vrot.slane %v744, 6
        %v1115 = vsel %vm1091, %v1113, %v1114
        %v1116 = vrot.slane %v745, 6
        %v1117 = vrot.slane %v746, 6
        %v1118 = vsel %vm1091, %v1116, %v1117
        %v1119 = vrot.slane %v747, 6
        %v1120 = vrot.slane %v748, 6
        %v1121 = vsel %vm1091, %v1119, %v1120
        %v1122 = vrot.slane %v749, 6
        %v1123 = vrot.slane %v750, 6
        %v1124 = vsel %vm1091, %v1122, %v1123
        %v1125 = vrot.slane %v751, 6
        %v1126 = vrot.slane %v752, 6
        %v1127 = vsel %vm1091, %v1125, %v1126
        %v1128 = vrot.slane %v753, 6
        %v1129 = vrot.slane %v754, 6
        %v1130 = vsel %vm1091, %v1128, %v1129
        %v1131 = vrot.slane %v755, 6
        %v1132 = vrot.slane %v756, 6
        %v1133 = vsel %vm1091, %v1131, %v1132
        %v1134 = vrot.slane %v757, 6
        %v1135 = vrot.slane %v758, 6
        %v1136 = vsel %vm1091, %v1134, %v1135
        %v1137 = vrot.slane %v759, 6
        %v1138 = vrot.slane %v760, 6
        %v1139 = vsel %vm1091, %v1137, %v1138
        %v1140 = vrot.slane %v761, 6
        %v1141 = vrot.slane %v762, 6
        %v1142 = vsel %vm1091, %v1140, %v1141
        %v1143 = vrot.slane %v763, 6
        %v1144 = vrot.slane %v764, 6
        %v1145 = vsel %vm1091, %v1143, %v1144
        %v1146 = vrot.slane %v765, 6
        %v1147 = vrot.slane %v766, 6
        %v1148 = vsel %vm1091, %v1146, %v1147
        %v1149 = vrot.slane %v767, 6
        %v1150 = vrot.slane %v768, 6
        %v1151 = vsel %vm1091, %v1149, %v1150
        %v1172 = vadd.f32 %v1071, %v1094
        %v1173 = vadd.f32 %v1072, %v1097
        %v1174 = vadd.f32 %v1073, %v1100
        %v1175 = vadd.f32 %v1074, %v1103
        %v1176 = vadd.f32 %v1075, %v1106
        %v1177 = vadd.f32 %v1076, %v1109
        %v1178 = vadd.f32 %v1077, %v1112
        %v1179 = vadd.f32 %v1078, %v1115
        %v1180 = vadd.f32 %v1079, %v1118
        %v1181 = vadd.f32 %v1080, %v1121
        %v1182 = vadd.f32 %v1081, %v1124
        %v1183 = vadd.f32 %v1082, %v1127
        %v1184 = vadd.f32 %v1083, %v1130
        %v1185 = vadd.f32 %v1084, %v1133
        %v1186 = vadd.f32 %v1085, %v1136
        %v1187 = vadd.f32 %v1086, %v1139
        %v1188 = vadd.f32 %v1087, %v1142
        %v1189 = vadd.f32 %v1088, %v1145
        %v1190 = vadd.f32 %v1089, %v1148
        %v1191 = vadd.f32 %v1090, %v1151
        %vm1192 = vcmask 1040384
        %v1193 = vrot.slane %v548, 7
        %v1194 = vrot.slane %v549, 7
        %v1195 = vsel %vm1192, %v1193, %v1194
        %v1196 = vrot.slane %v550, 7
        %v1197 = vrot.slane %v551, 7
        %v1198 = vsel %vm1192, %v1196, %v1197
        %v1199 = vrot.slane %v552, 7
        %v1200 = vrot.slane %v553, 7
        %v1201 = vsel %vm1192, %v1199, %v1200
        %v1202 = vrot.slane %v554, 7
        %v1203 = vrot.slane %v555, 7
        %v1204 = vsel %vm1192, %v1202, %v1203
        %v1205 = vrot.slane %v556, 7
        %v1206 = vrot.slane %v557, 7
        %v1207 = vsel %vm1192, %v1205, %v1206
        %v1208 = vrot.slane %v558, 7
        %v1209 = vrot.slane %v559, 7
        %v1210 = vsel %vm1192, %v1208, %v1209
        %v1211 = vrot.slane %v560, 7
        %v1212 = vrot.slane %v561, 7
        %v1213 = vsel %vm1192, %v1211, %v1212
        %v1214 = vrot.slane %v562, 7
        %v1215 = vrot.slane %v563, 7
        %v1216 = vsel %vm1192, %v1214, %v1215
        %v1217 = vrot.slane %v564, 7
        %v1218 = vrot.slane %v565, 7
        %v1219 = vsel %vm1192, %v1217, %v1218
        %v1220 = vrot.slane %v566, 7
        %v1221 = vrot.slane %v567, 7
        %v1222 = vsel %vm1192, %v1220, %v1221
        %v1223 = vrot.slane %v568, 7
        %v1224 = vrot.slane %v569, 7
        %v1225 = vsel %vm1192, %v1223, %v1224
        %v1226 = vrot.slane %v570, 7
        %v1227 = vrot.slane %v571, 7
        %v1228 = vsel %vm1192, %v1226, %v1227
        %v1229 = vrot.slane %v572, 7
        %v1230 = vrot.slane %v573, 7
        %v1231 = vsel %vm1192, %v1229, %v1230
        %v1232 = vrot.slane %v574, 7
        %v1233 = vrot.slane %v575, 7
        %v1234 = vsel %vm1192, %v1232, %v1233
        %v1235 = vrot.slane %v576, 7
        %v1236 = vrot.slane %v577, 7
        %v1237 = vsel %vm1192, %v1235, %v1236
        %v1238 = vrot.slane %v578, 7
        %v1239 = vrot.slane %v579, 7
        %v1240 = vsel %vm1192, %v1238, %v1239
        %v1241 = vrot.slane %v580, 7
        %v1242 = vrot.slane %v581, 7
        %v1243 = vsel %vm1192, %v1241, %v1242
        %v1244 = vrot.slane %v582, 7
        %v1245 = vrot.slane %v583, 7
        %v1246 = vsel %vm1192, %v1244, %v1245
        %v1247 = vrot.slane %v584, 7
        %v1248 = vrot.slane %v585, 7
        %v1249 = vsel %vm1192, %v1247, %v1248
        %v1250 = vrot.slane %v586, 7
        %v1251 = vrot.slane %v587, 7
        %v1252 = vsel %vm1192, %v1250, %v1251
        %v1273 = vadd.f32 %v1172, %v1195
        %v1274 = vadd.f32 %v1173, %v1198
        %v1275 = vadd.f32 %v1174, %v1201
        %v1276 = vadd.f32 %v1175, %v1204
        %v1277 = vadd.f32 %v1176, %v1207
        %v1278 = vadd.f32 %v1177, %v1210
        %v1279 = vadd.f32 %v1178, %v1213
        %v1280 = vadd.f32 %v1179, %v1216
        %v1281 = vadd.f32 %v1180, %v1219
        %v1282 = vadd.f32 %v1181, %v1222
        %v1283 = vadd.f32 %v1182, %v1225
        %v1284 = vadd.f32 %v1183, %v1228
        %v1285 = vadd.f32 %v1184, %v1231
        %v1286 = vadd.f32 %v1185, %v1234
        %v1287 = vadd.f32 %v1186, %v1237
        %v1288 = vadd.f32 %v1187, %v1240
        %v1289 = vadd.f32 %v1188, %v1243
        %v1290 = vadd.f32 %v1189, %v1246
        %v1291 = vadd.f32 %v1190, %v1249
        %v1292 = vadd.f32 %v1191, %v1252
        %v1293 = vmul.f32 %v289, 0.036000773
        %v1294 = vmul.f32 %v291, 0.036000773
        %v1295 = vmul.f32 %v293, 0.036000773
        %v1296 = vmul.f32 %v295, 0.036000773
        %v1297 = vmul.f32 %v297, 0.036000773
        %v1298 = vmul.f32 %v299, 0.036000773
        %v1299 = vmul.f32 %v301, 0.036000773
        %v1300 = vmul.f32 %v303, 0.036000773
        %v1301 = vmul.f32 %v305, 0.036000773
        %v1302 = vmul.f32 %v307, 0.036000773
        %v1303 = vmul.f32 %v309, 0.036000773
        %v1304 = vmul.f32 %v311, 0.036000773
        %v1305 = vmul.f32 %v313, 0.036000773
        %v1306 = vmul.f32 %v315, 0.036000773
        %v1307 = vmul.f32 %v317, 0.036000773
        %v1308 = vmul.f32 %v319, 0.036000773
        %v1309 = vmul.f32 %v321, 0.036000773
        %v1310 = vmul.f32 %v323, 0.036000773
        %v1311 = vmul.f32 %v325, 0.036000773
        %v1312 = vmul.f32 %v327, 0.036000773
        %v1313 = vadd.f32 %v1273, %v1293
        %v1314 = vadd.f32 %v1274, %v1294
        %v1315 = vadd.f32 %v1275, %v1295
        %v1316 = vadd.f32 %v1276, %v1296
        %v1317 = vadd.f32 %v1277, %v1297
        %v1318 = vadd.f32 %v1278, %v1298
        %v1319 = vadd.f32 %v1279, %v1299
        %v1320 = vadd.f32 %v1280, %v1300
        %v1321 = vadd.f32 %v1281, %v1301
        %v1322 = vadd.f32 %v1282, %v1302
        %v1323 = vadd.f32 %v1283, %v1303
        %v1324 = vadd.f32 %v1284, %v1304
        %v1325 = vadd.f32 %v1285, %v1305
        %v1326 = vadd.f32 %v1286, %v1306
        %v1327 = vadd.f32 %v1287, %v1307
        %v1328 = vadd.f32 %v1288, %v1308
        %v1329 = vadd.f32 %v1289, %v1309
        %v1330 = vadd.f32 %v1290, %v1310
        %v1331 = vadd.f32 %v1291, %v1311
        %v1332 = vadd.f32 %v1292, %v1312
        %v1333 = vmul.f32 %v289, 0.007598758
        %v1334 = vmul.f32 %v291, 0.007598758
        %v1335 = vmul.f32 %v293, 0.007598758
        %v1336 = vmul.f32 %v295, 0.007598758
        %v1337 = vmul.f32 %v297, 0.007598758
        %v1338 = vmul.f32 %v299, 0.007598758
        %v1339 = vmul.f32 %v301, 0.007598758
        %v1340 = vmul.f32 %v303, 0.007598758
        %v1341 = vmul.f32 %v305, 0.007598758
        %v1342 = vmul.f32 %v307, 0.007598758
        %v1343 = vmul.f32 %v309, 0.007598758
        %v1344 = vmul.f32 %v311, 0.007598758
        %v1345 = vmul.f32 %v313, 0.007598758
        %v1346 = vmul.f32 %v315, 0.007598758
        %v1347 = vmul.f32 %v317, 0.007598758
        %v1348 = vmul.f32 %v319, 0.007598758
        %v1349 = vmul.f32 %v321, 0.007598758
        %v1350 = vmul.f32 %v323, 0.007598758
        %v1351 = vmul.f32 %v325, 0.007598758
        %v1352 = vmul.f32 %v327, 0.007598758
        %v1373 = vrot.slane %v1333, 1
        %v1374 = vrot.slane %v1334, 1
        %v1375 = vrot.slane %v1335, 1
        %v1376 = vrot.slane %v1336, 1
        %v1377 = vrot.slane %v1337, 1
        %v1378 = vrot.slane %v1338, 1
        %v1379 = vrot.slane %v1339, 1
        %v1380 = vrot.slane %v1340, 1
        %v1381 = vrot.slane %v1341, 1
        %v1382 = vrot.slane %v1342, 1
        %v1383 = vrot.slane %v1343, 1
        %v1384 = vrot.slane %v1344, 1
        %v1385 = vrot.slane %v1345, 1
        %v1386 = vrot.slane %v1346, 1
        %v1387 = vrot.slane %v1347, 1
        %v1388 = vrot.slane %v1348, 1
        %v1389 = vrot.slane %v1349, 1
        %v1390 = vrot.slane %v1350, 1
        %v1391 = vrot.slane %v1351, 1
        %v1392 = vrot.slane %v1352, 1
        %v1413 = vadd.f32 %v1313, %v1373
        %v1414 = vadd.f32 %v1314, %v1374
        %v1415 = vadd.f32 %v1315, %v1375
        %v1416 = vadd.f32 %v1316, %v1376
        %v1417 = vadd.f32 %v1317, %v1377
        %v1418 = vadd.f32 %v1318, %v1378
        %v1419 = vadd.f32 %v1319, %v1379
        %v1420 = vadd.f32 %v1320, %v1380
        %v1421 = vadd.f32 %v1321, %v1381
        %v1422 = vadd.f32 %v1322, %v1382
        %v1423 = vadd.f32 %v1323, %v1383
        %v1424 = vadd.f32 %v1324, %v1384
        %v1425 = vadd.f32 %v1325, %v1385
        %v1426 = vadd.f32 %v1326, %v1386
        %v1427 = vadd.f32 %v1327, %v1387
        %v1428 = vadd.f32 %v1328, %v1388
        %v1429 = vadd.f32 %v1329, %v1389
        %v1430 = vadd.f32 %v1330, %v1390
        %v1431 = vadd.f32 %v1331, %v1391
        %v1432 = vadd.f32 %v1332, %v1392
        %v1433 = vmul.f32 %v289, 0.0010283801
        %v1434 = vmul.f32 %v291, 0.0010283801
        %v1435 = vmul.f32 %v293, 0.0010283801
        %v1436 = vmul.f32 %v295, 0.0010283801
        %v1437 = vmul.f32 %v297, 0.0010283801
        %v1438 = vmul.f32 %v299, 0.0010283801
        %v1439 = vmul.f32 %v301, 0.0010283801
        %v1440 = vmul.f32 %v303, 0.0010283801
        %v1441 = vmul.f32 %v305, 0.0010283801
        %v1442 = vmul.f32 %v307, 0.0010283801
        %v1443 = vmul.f32 %v309, 0.0010283801
        %v1444 = vmul.f32 %v311, 0.0010283801
        %v1445 = vmul.f32 %v313, 0.0010283801
        %v1446 = vmul.f32 %v315, 0.0010283801
        %v1447 = vmul.f32 %v317, 0.0010283801
        %v1448 = vmul.f32 %v319, 0.0010283801
        %v1449 = vmul.f32 %v321, 0.0010283801
        %v1450 = vmul.f32 %v323, 0.0010283801
        %v1451 = vmul.f32 %v325, 0.0010283801
        %v1452 = vmul.f32 %v327, 0.0010283801
        %v1473 = vrot.slane %v1433, 2
        %v1474 = vrot.slane %v1434, 2
        %v1475 = vrot.slane %v1435, 2
        %v1476 = vrot.slane %v1436, 2
        %v1477 = vrot.slane %v1437, 2
        %v1478 = vrot.slane %v1438, 2
        %v1479 = vrot.slane %v1439, 2
        %v1480 = vrot.slane %v1440, 2
        %v1481 = vrot.slane %v1441, 2
        %v1482 = vrot.slane %v1442, 2
        %v1483 = vrot.slane %v1443, 2
        %v1484 = vrot.slane %v1444, 2
        %v1485 = vrot.slane %v1445, 2
        %v1486 = vrot.slane %v1446, 2
        %v1487 = vrot.slane %v1447, 2
        %v1488 = vrot.slane %v1448, 2
        %v1489 = vrot.slane %v1449, 2
        %v1490 = vrot.slane %v1450, 2
        %v1491 = vrot.slane %v1451, 2
        %v1492 = vrot.slane %v1452, 2
        %v1513 = vadd.f32 %v1413, %v1473
        %v1514 = vadd.f32 %v1414, %v1474
        %v1515 = vadd.f32 %v1415, %v1475
        %v1516 = vadd.f32 %v1416, %v1476
        %v1517 = vadd.f32 %v1417, %v1477
        %v1518 = vadd.f32 %v1418, %v1478
        %v1519 = vadd.f32 %v1419, %v1479
        %v1520 = vadd.f32 %v1420, %v1480
        %v1521 = vadd.f32 %v1421, %v1481
        %v1522 = vadd.f32 %v1422, %v1482
        %v1523 = vadd.f32 %v1423, %v1483
        %v1524 = vadd.f32 %v1424, %v1484
        %v1525 = vadd.f32 %v1425, %v1485
        %v1526 = vadd.f32 %v1426, %v1486
        %v1527 = vadd.f32 %v1427, %v1487
        %v1528 = vadd.f32 %v1428, %v1488
        %v1529 = vadd.f32 %v1429, %v1489
        %v1530 = vadd.f32 %v1430, %v1490
        %v1531 = vadd.f32 %v1431, %v1491
        %v1532 = vadd.f32 %v1432, %v1492
        %v1553 = vrot.slane %v1513, 2
        %v1554 = vrot.slane %v1513, 4
        %v1555 = vrot.slane %v1514, 2
        %v1556 = vrot.slane %v1514, 4
        %v1557 = vrot.slane %v1515, 2
        %v1558 = vrot.slane %v1515, 4
        %v1559 = vrot.slane %v1516, 2
        %v1560 = vrot.slane %v1516, 4
        %v1561 = vrot.slane %v1517, 2
        %v1562 = vrot.slane %v1517, 4
        %v1563 = vrot.slane %v1518, 2
        %v1564 = vrot.slane %v1518, 4
        %v1565 = vrot.slane %v1519, 2
        %v1566 = vrot.slane %v1519, 4
        %v1567 = vrot.slane %v1520, 2
        %v1568 = vrot.slane %v1520, 4
        %v1569 = vrot.slane %v1521, 2
        %v1570 = vrot.slane %v1521, 4
        %v1571 = vrot.slane %v1522, 2
        %v1572 = vrot.slane %v1522, 4
        %v1573 = vrot.slane %v1523, 2
        %v1574 = vrot.slane %v1523, 4
        %v1575 = vrot.slane %v1524, 2
        %v1576 = vrot.slane %v1524, 4
        %v1577 = vrot.slane %v1525, 2
        %v1578 = vrot.slane %v1525, 4
        %v1579 = vrot.slane %v1526, 2
        %v1580 = vrot.slane %v1526, 4
        %v1581 = vrot.slane %v1527, 2
        %v1582 = vrot.slane %v1527, 4
        %v1583 = vrot.slane %v1528, 2
        %v1584 = vrot.slane %v1528, 4
        %v1585 = vrot.slane %v1529, 2
        %v1586 = vrot.slane %v1529, 4
        %v1587 = vrot.slane %v1530, 2
        %v1588 = vrot.slane %v1530, 4
        %v1589 = vrot.slane %v1531, 2
        %v1590 = vrot.slane %v1531, 4
        %v1591 = vrot.slane %v1532, 2
        %v1592 = vrot.slane %v1532, 4
        %v1593 = vld [vmem:[#allocation5] sm:$0xff]
        %v1594 = vld [vmem:[#allocation5 + $0x8] sm:$0xff]
        %1595 = vst [vmem:[#allocation1] ss:$4 sm:$0xff] %v1513
        %s1596 = scalar_lea.vmem [#allocation1], 1
        %1597 = vst [vmem:[%s1596] ss:$4 sm:$0xff] %v1553
        %s1598 = scalar_lea.vmem [#allocation1], 2
        %1599 = vst [vmem:[%s1598] ss:$4 sm:$0xff] %v1554
        %s1600 = scalar_lea.vmem [#allocation1], 3
        %1601 = vst [vmem:[%s1600] ss:$4 sm:$0xff] %v1514
        %s1602 = scalar_lea.vmem [#allocation1], 32
        %1603 = vst [vmem:[%s1602] ss:$4 sm:$0xff] %v1555
        %s1604 = scalar_lea.vmem [#allocation1], 33
        %1605 = vst [vmem:[%s1604] ss:$4 sm:$0xff] %v1556
        %s1606 = scalar_lea.vmem [#allocation1], 34
        %1607 = vst [vmem:[%s1606] ss:$4 sm:$0xff] %v1515
        %s1608 = scalar_lea.vmem [#allocation1], 35
        %1609 = vst [vmem:[%s1608] ss:$4 sm:$0xff] %v1557
        %v1610 = vld.sshfl [vmem:[#allocation1] sm:$0xff pattern:$0x73625140]
        %v1611 = vld.sshfl [vmem:[#allocation1 + $0x20] sm:$0xff pattern:$0x73625140]
        %1612 = vst [vmem:[#allocation1] ss:$4 sm:$0xff] %v1558
        %1613 = vst [vmem:[%s1596] ss:$4 sm:$0xff] %v1516
        %1614 = vst [vmem:[%s1598] ss:$4 sm:$0xff] %v1559
        %1615 = vst [vmem:[%s1600] ss:$4 sm:$0xff] %v1560
        %1616 = vst [vmem:[%s1602] ss:$4 sm:$0xff] %v1517
        %1617 = vst [vmem:[%s1604] ss:$4 sm:$0xff] %v1561
        %1618 = vst [vmem:[%s1606] ss:$4 sm:$0xff] %v1562
        %1619 = vst [vmem:[%s1608] ss:$4 sm:$0xff] %v1518
        %v1620 = vld.sshfl [vmem:[#allocation1] sm:$0xff pattern:$0x73625140]
        %v1621 = vld.sshfl [vmem:[#allocation1 + $0x20] sm:$0xff pattern:$0x73625140]
        %1622 = vst [vmem:[#allocation1] ss:$4 sm:$0xff] %v1563
        %1623 = vst [vmem:[%s1596] ss:$4 sm:$0xff] %v1564
        %1624 = vst [vmem:[%s1598] ss:$4 sm:$0xff] %v1519
        %1625 = vst [vmem:[%s1600] ss:$4 sm:$0xff] %v1565
        %1626 = vst [vmem:[%s1602] ss:$4 sm:$0xff] %v1566
        %1627 = vst [vmem:[%s1604] ss:$4 sm:$0xff] %v1520
        %1628 = vst [vmem:[%s1606] ss:$4 sm:$0xff] %v1567
        %1629 = vst [vmem:[%s1608] ss:$4 sm:$0xff] %v1568
        %v1630 = vld.sshfl [vmem:[#allocation1] sm:$0xff pattern:$0x73625140]
        %v1631 = vld.sshfl [vmem:[#allocation1 + $0x20] sm:$0xff pattern:$0x73625140]
        %1632 = vst [vmem:[#allocation1] ss:$4 sm:$0xff] %v1521
        %1633 = vst [vmem:[%s1596] ss:$4 sm:$0xff] %v1569
        %1634 = vst [vmem:[%s1598] ss:$4 sm:$0xff] %v1570
        %1635 = vst [vmem:[%s1600] ss:$4 sm:$0xff] %v1522
        %1636 = vst [vmem:[%s1602] ss:$4 sm:$0xff] %v1571
        %1637 = vst [vmem:[%s1604] ss:$4 sm:$0xff] %v1572
        %1638 = vst [vmem:[%s1606] ss:$4 sm:$0xff] %v1523
        %1639 = vst [vmem:[%s1608] ss:$4 sm:$0xff] %v1573
        %v1640 = vld.sshfl [vmem:[#allocation1] sm:$0xff pattern:$0x73625140]
        %v1641 = vld.sshfl [vmem:[#allocation1 + $0x20] sm:$0xff pattern:$0x73625140]
        %1642 = vst [vmem:[#allocation1] ss:$4 sm:$0xff] %v1574
        %1643 = vst [vmem:[%s1596] ss:$4 sm:$0xff] %v1524
        %1644 = vst [vmem:[%s1598] ss:$4 sm:$0xff] %v1575
        %1645 = vst [vmem:[%s1600] ss:$4 sm:$0xff] %v1576
        %1646 = vst [vmem:[%s1602] ss:$4 sm:$0xff] %v1525
        %1647 = vst [vmem:[%s1604] ss:$4 sm:$0xff] %v1577
        %1648 = vst [vmem:[%s1606] ss:$4 sm:$0xff] %v1578
        %1649 = vst [vmem:[%s1608] ss:$4 sm:$0xff] %v1526
        %v1650 = vld.sshfl [vmem:[#allocation1] sm:$0xff pattern:$0x73625140]
        %v1651 = vld.sshfl [vmem:[#allocation1 + $0x20] sm:$0xff pattern:$0x73625140]
        %1652 = vst [vmem:[#allocation1] ss:$4 sm:$0xff] %v1579
        %1653 = vst [vmem:[%s1596] ss:$4 sm:$0xff] %v1580
        %1654 = vst [vmem:[%s1598] ss:$4 sm:$0xff] %v1527
        %1655 = vst [vmem:[%s1600] ss:$4 sm:$0xff] %v1581
        %1656 = vst [vmem:[%s1602] ss:$4 sm:$0xff] %v1582
        %1657 = vst [vmem:[%s1604] ss:$4 sm:$0xff] %v1528
        %1658 = vst [vmem:[%s1606] ss:$4 sm:$0xff] %v1583
        %1659 = vst [vmem:[%s1608] ss:$4 sm:$0xff] %v1584
        %v1660 = vld.sshfl [vmem:[#allocation1] sm:$0xff pattern:$0x73625140]
        %v1661 = vld.sshfl [vmem:[#allocation1 + $0x20] sm:$0xff pattern:$0x73625140]
        %1662 = vst [vmem:[#allocation1] ss:$4 sm:$0xff] %v1529
        %1663 = vst [vmem:[%s1596] ss:$4 sm:$0xff] %v1585
        %1664 = vst [vmem:[%s1598] ss:$4 sm:$0xff] %v1586
        %1665 = vst [vmem:[%s1600] ss:$4 sm:$0xff] %v1530
        %1666 = vst [vmem:[%s1602] ss:$4 sm:$0xff] %v1587
        %1667 = vst [vmem:[%s1604] ss:$4 sm:$0xff] %v1588
        %1668 = vst [vmem:[%s1606] ss:$4 sm:$0xff] %v1531
        %1669 = vst [vmem:[%s1608] ss:$4 sm:$0xff] %v1589
        %v1670 = vld.sshfl [vmem:[#allocation1] sm:$0xff pattern:$0x73625140]
        %v1671 = vld.sshfl [vmem:[#allocation1 + $0x20] sm:$0xff pattern:$0x73625140]
        %1672 = vst [vmem:[#allocation1] ss:$4 sm:$0xff] %v1590
        %1673 = vst [vmem:[%s1596] ss:$4 sm:$0xff] %v1532
        %1674 = vst [vmem:[%s1598] ss:$4 sm:$0xff] %v1591
        %1675 = vst [vmem:[%s1600] ss:$4 sm:$0xff] %v1592
        %v1676 = vld.sshfl [vmem:[#allocation1] sm:$0xff pattern:$0x73625140]
        %vm1677 = vcmask 130048
        %v1678 = vsel %vm1677, %v1610, 0
        %v1680 = vsel %vm1677, %v1611, 0
        %v1682 = vsel %vm1677, %v1620, 0
        %v1684 = vsel %vm1677, %v1621, 0
        %v1686 = vsel %vm1677, %v1630, 0
        %v1688 = vsel %vm1677, %v1631, 0
        %v1690 = vsel %vm1677, %v1640, 0
        %v1692 = vsel %vm1677, %v1641, 0
        %v1694 = vsel %vm1677, %v1650, 0
        %v1696 = vsel %vm1677, %v1651, 0
        %v1698 = vsel %vm1677, %v1660, 0
        %v1700 = vsel %vm1677, %v1661, 0
        %v1702 = vsel %vm1677, %v1670, 0
        %v1704 = vsel %vm1677, %v1671, 0
        %v1706 = vsel %vm1677, %v1676, 0
        %1708 = vmatpush.msra.mxu0 0.0
        %1709 = vmatpush.msra.mxu0 0.0
        %1710 = vmatpush.msra.mxu0 0.0
        %1711 = vmatpush.msra.mxu0 0.0
        %1712 = vmatpush.msra.mxu0 0.0
        %1713 = vmatpush.msra.mxu0 0.0
        %1714 = vmatpush.msra.mxu0 0.0
        %1715 = vmatpush.msra.mxu0 0.0
        %1716 = vmatpush.msra.mxu0 0.0
        %1717 = vmatpush.msra.mxu0 0.0
        %1718 = vmatpush.msra.mxu0 0.0
        %1719 = vmatpush.msra.mxu0 0.0
        %1720 = vmatpush.msra.mxu0 0.0
        %1721 = vmatpush.msra.mxu0 0.0
        %1722 = vmatpush.msra.mxu0 %v1594
        %1723 = vmatpush.msra.mxu0 %v1593
        %1724 = vmatmul.f32.gmra.mxu0 %v1678
        %v1725 = vpop.f32.mrf.mxu0
        %v1726 = vadd.f32 0.0, %v1725
        %1727 = vmatmul.f32.gmra.mxu0 %v1680
        %v1728 = vpop.f32.mrf.mxu0
        %v1729 = vadd.f32 0.0, %v1728
        %1730 = vmatmul.f32.gmra.mxu0 %v1682
        %v1731 = vpop.f32.mrf.mxu0
        %v1732 = vadd.f32 0.0, %v1731
        %1733 = vmatmul.f32.gmra.mxu0 %v1684
        %v1734 = vpop.f32.mrf.mxu0
        %v1735 = vadd.f32 0.0, %v1734
        %1736 = vmatmul.f32.gmra.mxu0 %v1686
        %v1737 = vpop.f32.mrf.mxu0
        %v1738 = vadd.f32 0.0, %v1737
        %1739 = vmatmul.f32.gmra.mxu0 %v1688
        %v1740 = vpop.f32.mrf.mxu0
        %v1741 = vadd.f32 0.0, %v1740
        %1742 = vmatmul.f32.gmra.mxu0 %v1690
        %v1743 = vpop.f32.mrf.mxu0
        %v1744 = vadd.f32 0.0, %v1743
        %1745 = vmatmul.f32.gmra.mxu0 %v1692
        %v1746 = vpop.f32.mrf.mxu0
        %v1747 = vadd.f32 0.0, %v1746
        %1748 = vmatmul.f32.gmra.mxu0 %v1694
        %v1749 = vpop.f32.mrf.mxu0
        %v1750 = vadd.f32 0.0, %v1749
        %1751 = vmatmul.f32.gmra.mxu0 %v1696
        %v1752 = vpop.f32.mrf.mxu0
        %v1753 = vadd.f32 0.0, %v1752
        %1754 = vmatmul.f32.gmra.mxu0 %v1698
        %v1755 = vpop.f32.mrf.mxu0
        %v1756 = vadd.f32 0.0, %v1755
        %1757 = vmatmul.f32.gmra.mxu0 %v1700
        %v1758 = vpop.f32.mrf.mxu0
        %v1759 = vadd.f32 0.0, %v1758
        %1760 = vmatmul.f32.gmra.mxu0 %v1702
        %v1761 = vpop.f32.mrf.mxu0
        %v1762 = vadd.f32 0.0, %v1761
        %1763 = vmatmul.f32.gmra.mxu0 %v1704
        %v1764 = vpop.f32.mrf.mxu0
        %v1765 = vadd.f32 0.0, %v1764
        %1766 = vmatmul.f32.gmra.mxu0 %v1706
        %v1767 = vpop.f32.mrf.mxu0
        %v1768 = vadd.f32 0.0, %v1767
        %1769 = vdwg.mxu0
        %v1770 = vmul.f32 %v1726, %v1726
        %v1771 = vmul.f32 %v1729, %v1729
        %v1772 = vmul.f32 %v1732, %v1732
        %v1773 = vmul.f32 %v1735, %v1735
        %v1774 = vmul.f32 %v1738, %v1738
        %v1775 = vmul.f32 %v1741, %v1741
        %v1776 = vmul.f32 %v1726, %v1735
        %v1777 = vmul.f32 %v1729, %v1738
        %v1778 = vmul.f32 %v1732, %v1741
        %v1779 = vsub.f32 %v1744, %v1770
        %v1780 = vsub.f32 %v1747, %v1771
        %v1781 = vsub.f32 %v1750, %v1772
        %v1782 = vsub.f32 %v1753, %v1773
        %v1783 = vsub.f32 %v1756, %v1774
        %v1784 = vsub.f32 %v1759, %v1775
        %v1785 = vsub.f32 %v1762, %v1776
        %v1786 = vsub.f32 %v1765, %v1777
        %v1787 = vsub.f32 %v1768, %v1778
        %v1788 = vmul.f32 %v1785, 2.0
        %v1789 = vmul.f32 %v1786, 2.0
        %v1790 = vmul.f32 %v1787, 2.0
        %v1791 = vstv %s287
        %v1792 = vadd.f32 %v1788, %v1791
        %v1793 = vadd.f32 %v1789, %v1791
        %v1794 = vadd.f32 %v1790, %v1791
        %v1795 = vadd.f32 %v1779, %v1782
        %v1796 = vadd.f32 %v1780, %v1783
        %v1797 = vadd.f32 %v1781, %v1784
        %v1798 = vadd.f32 %v1795, %v1791
        %v1799 = vadd.f32 %v1796, %v1791
        %v1800 = vadd.f32 %v1797, %v1791
        %v1801 = vmul.f32 %v1776, 2.0
        %v1802 = vmul.f32 %v1777, 2.0
        %v1803 = vmul.f32 %v1778, 2.0
        %v1804 = vstv %s286
        %v1805 = vadd.f32 %v1801, %v1804
        %v1806 = vadd.f32 %v1802, %v1804
        %v1807 = vadd.f32 %v1803, %v1804
        %v1808 = vmul.f32 %v1805, %v1792
        %v1809 = vmul.f32 %v1806, %v1793
        %v1810 = vmul.f32 %v1807, %v1794
        %v1811 = vadd.f32 %v1770, %v1773
        %v1812 = vadd.f32 %v1771, %v1774
        %v1813 = vadd.f32 %v1772, %v1775
        %v1814 = vadd.f32 %v1811, %v1804
        %v1815 = vadd.f32 %v1812, %v1804
        %v1816 = vadd.f32 %v1813, %v1804
        %v1817 = vmul.f32 %v1814, %v1798
        %v1818 = vmul.f32 %v1815, %v1799
        %v1819 = vmul.f32 %v1816, %v1800
        %v1820 = vrcp.pop %v1817
        %v1821 = vmul.f32 %v1817, %v1820
        %v1822 = vsub.f32 1.0, %v1821
        %v1823 = vmul.f32 %v1820, %v1822
        %v1824 = vadd.f32 %v1820, %v1823
        %vm1825 = vweird.f32 %v1817
        %vm1826 = vweird.f32 %v1820
        %vm1827 = vmor %vm1825, %vm1826
        %v1828 = vsel %vm1827, %v1820, %v1824
        %v1829 = vand.u32 2147483647, %v1817
        %vm1830 = vcmp.eq.f32.partialorder %v1829, 8.507059e+37
        %v1831 = vand.u32 %v1817, 2147483648
        %v1832 = vor.u32 1.1754944e-38, %v1831
        %v1833 = vsel %vm1830, %v1832, %v1828
        %v1834 = vmul.f32 %v1808, %v1833
        %v1835 = vrcp.pop %v1818
        %v1836 = vmul.f32 %v1818, %v1835
        %v1837 = vsub.f32 1.0, %v1836
        %v1838 = vmul.f32 %v1835, %v1837
        %v1839 = vadd.f32 %v1835, %v1838
        %vm1840 = vweird.f32 %v1818
        %vm1841 = vweird.f32 %v1835
        %vm1842 = vmor %vm1840, %vm1841
        %v1843 = vsel %vm1842, %v1835, %v1839
        %v1844 = vand.u32 2147483647, %v1818
        %vm1845 = vcmp.eq.f32.partialorder %v1844, 8.507059e+37
        %v1846 = vand.u32 %v1818, 2147483648
        %v1847 = vor.u32 1.1754944e-38, %v1846
        %v1848 = vsel %vm1845, %v1847, %v1843
        %v1849 = vmul.f32 %v1809, %v1848
        %v1850 = vrcp.pop %v1819
        %v1851 = vmul.f32 %v1819, %v1850
        %v1852 = vsub.f32 1.0, %v1851
        %v1853 = vmul.f32 %v1850, %v1852
        %v1854 = vadd.f32 %v1850, %v1853
        %vm1855 = vweird.f32 %v1819
        %vm1856 = vweird.f32 %v1850
        %vm1857 = vmor %vm1855, %vm1856
        %v1858 = vsel %vm1857, %v1850, %v1854
        %v1859 = vand.u32 2147483647, %v1819
        %vm1860 = vcmp.eq.f32.partialorder %v1859, 8.507059e+37
        %v1861 = vand.u32 %v1819, 2147483648
        %v1862 = vor.u32 1.1754944e-38, %v1861
        %v1863 = vsel %vm1860, %v1862, %v1858
        %v1864 = vmul.f32 %v1810, %v1863
        %v1865 = vlaneseq
        %v1866 = vand.u32 %v1865, 127
        %vm1867 = vcmp.lt.s32.totalorder %v1866, 6
        %v1868 = vsel %vm1867, %v1834, 0.0
        %v1869 = vsel %vm1867, %v1849, 0.0
        %v1870 = vsel %vm1867, %v1864, 0.0
        %1871 = vadd.xlane.f32.xlu0 %v1868
        %v1872 = vpop.xlane.xlu0 %1871
        %1873 = vadd.xlane.f32.xlu0 %v1869
        %v1874 = vpop.xlane.xlu0 %1873
        %1875 = vadd.xlane.f32.xlu0 %v1870
        %v1876 = vpop.xlane.xlu0 %1875
        %v1877 = vadd.f32 %v1872, %v1874
        %v1878 = vadd.f32 %v1877, %v1876
        %v1879 = vrot.slane %v1878, 4
        %v1880 = vadd.f32 %v1878, %v1879
        %v1881 = vrot.slane %v1880, 2
        %v1882 = vadd.f32 %v1880, %v1881
        %v1883 = vrot.slane %v1882, 1
        %v1884 = vadd.f32 %v1882, %v1883
        %vm1885 = vcmask 0
        %1886 = vst.msk [vmem:[%s285] sm:$0x1] %vm1885, %v1884
        %p1887 = scmp.lt.s32.totalorder %s20, 1
        %s1888 = scalar_select %p1887, %s20, 1
        %s1889 = scalar_lea.vmem %s4, %s1888
        // Predicated region
        $region53: #{tpu_custom_call.1} parent=35 // pred_check
          %p1890 = pneg %p132
        $region54: #{tpu_custom_call.1} parent=35 // pred_check_branch
          %1892 = sbr.rel (%p1890) target = $region56
        $region55: #{tpu_custom_call.1} parent=35 // pred_region
          _
        $region56: #{tpu_custom_call.1} parent=35 // pred_fallthru
          _
      $region36: #{tpu_custom_call.1} parent=5 // pred_fallthru
        _
      %p1893 = scmp.le.s32.totalorder 2, %s15
      // Predicated region
      $region57: #{tpu_custom_call.1} parent=5 // pred_check
        %p1894 = pneg %p1893
      $region58: #{tpu_custom_call.1} parent=5 // pred_check_branch
        %1896 = sbr.rel (%p1894) target = $region60
      $region59: #{tpu_custom_call.1} parent=5 // pred_region
        %s1897 = ssub.s32 %s15, 2
        // Predicated region
        $region61: #{tpu_custom_call.1} parent=59 // pred_check
          %p1898 = pneg %p138
        $region62: #{tpu_custom_call.1} parent=59 // pred_check_branch
          %1900 = sbr.rel (%p1898) target = $region64
        $region63: #{tpu_custom_call.1} parent=59 // pred_region
          %p1901 = scmp.lt.s32.totalorder %s21, 1
          %s1902 = scalar_select %p1901, %s21, 1
          %s1903 = scalar_lea.vmem %s4, %s1902
        $region64: #{tpu_custom_call.1} parent=59 // pred_fallthru
          _
      $region60: #{tpu_custom_call.1} parent=5 // pred_fallthru
        _
    $region6: #{tpu_custom_call.1} parent=1 // loop_footer
      %s19 = sadd.s32 1, %s15
    $region7: #{tpu_custom_call.1} parent=1 // loop_footer_branch
      %14 = sbr.rel target = $region3
    $region8: #{tpu_custom_call.1} parent=1 // loop_exit
      _
    %1904 = vsyncpa [#allocation3], 1
    %s1905 = scalar_lea.sflag [#allocation3], 1
    %1906 = vsyncpa %s1905, 1
    %1907 = vsyncpa [#allocation7], 1
    %s1908 = scalar_lea.sflag [#allocation7], 1
    %1909 = vsyncpa %s1908, 1
    %1910 = vsyncpa [#allocation4], 1
    %s1911 = scalar_lea.sflag [#allocation4], 1
    %1912 = vsyncpa %s1911, 1

</llo_original>
